<compile_context>
chip_gen: v7x
topology: tpu7x:2x2x1
jax: 0.10.0
libtpu: 0.0.40
codegen_flags: <defaults>
</compile_context>

<pallas_src>
import jax
import jax.numpy as jnp
from jax.experimental import pallas as pl
from jax.experimental.pallas import tpu as pltpu


# ----------------------------------------------------------------------------
# Pallas kernels
# ----------------------------------------------------------------------------
def _conv_mm_kernel(a_ref, b_ref, shift_ref, o_ref):
    # a: (tm2, 2K) bf16, b: (2K, 2*Cout) bf16, shift: (1, 2*Cout) f32
    y = jnp.dot(a_ref[...], b_ref[...], preferred_element_type=jnp.float32)
    y = jnp.maximum(y + shift_ref[...], 0.0)          # BN shift + ReLU in f32
    o_ref[...] = y.astype(o_ref.dtype)                # bf16 writeback


def _maxpool_kernel(x_ref, o_ref):
    # x_ref: (1, OH1, OW2, 2C) packed bf16 conv output:
    #        lanes [0:C]  = channels at even conv output columns (2j)
    #        lanes [C:2C] = channels at odd  conv output columns (2j+1)
    # o_ref: (1, OH1//2, OW2, C) f32
    x = x_ref[0]
    oh1, ow2, cc = x.shape
    c = cc // 2
    # --- H taps first (full 128-lane work): rows 2r-1, 2r, 2r+1 -------------
    # Row -1 is replaced by zeros (safe: post-ReLU values are >= 0).
    xr = x.reshape(oh1 // 2, 2, ow2, cc)               # free leading-dim split
    zrow = jnp.zeros((1, ow2, cc), x.dtype)
    prev_odd = jnp.concatenate([zrow, xr[:-1, 1]], axis=0)   # conv row 2r-1
    hmax = jnp.maximum(jnp.maximum(prev_odd, xr[:, 0]), xr[:, 1])  # (OH2,OW2,2C)
    # --- W taps: conv cols 2j-1, 2j, 2j+1 (col -1 -> zeros) -----------------
    zcol = jnp.zeros((oh1 // 2, 1, c), x.dtype)
    left = jnp.concatenate([zcol, hmax[:, :-1, c:]], axis=1)  # conv col 2j-1
    out = jnp.maximum(jnp.maximum(left, hmax[:, :, :c]), hmax[:, :, c:])
    o_ref[0] = out.astype(o_ref.dtype)


# ----------------------------------------------------------------------------
# Helpers
# ----------------------------------------------------------------------------
def _round_up(x, m):
    return (x + m - 1) // m * m


def _choose_tm(m2, cap=1024):
    """Largest multiple-of-8 tile dividing m2 with >= 4 grid blocks if possible."""
    cap = max(8, min(cap, m2 // 4 if m2 >= 32 else m2))
    best = 0
    for cand in range(8, cap + 1, 8):
        if m2 % cand == 0:
            best = cand
    if best == 0:                      # no multiple-of-8 divisor: pad M instead
        best = min(_round_up(cap, 8), _round_up(m2, 8))
    return best


def _build_packed_patches(x_bf16, ksize, stride, pad):
    """im2col written ONCE, directly in the 2-pixel-packed (M/2, 2*K) layout.

    x_bf16: (N, H, W, C) bf16.  Returns (a2, (n, oh, ow)) with
    a2[(n*OH+oh)*OW//2 + ow//2, (ow%2)*K + (kh*ksize+kw)*C + ci]
        = x_pad[n, stride*oh+kh, stride*ow+kw, ci].
    The trailing reshape is a pure row-major relabel (no extra HBM pass).
    """
    n, h, w, c = x_bf16.shape
    oh = (h + 2 * pad - ksize) // stride + 1
    ow = (w + 2 * pad - ksize) // stride + 1
    assert ow % 2 == 0, "2-pixel packing needs an even conv output width"
    xp = jnp.pad(x_bf16, ((0, 0), (pad, pad), (pad, pad), (0, 0)))
    views = []
    for kh in range(ksize):
        for kw in range(ksize):
            views.append(xp[:, kh:kh + stride * (oh - 1) + 1:stride,
                             kw:kw + stride * (ow - 1) + 1:stride, :])
    patches = jnp.concatenate(views, axis=-1)          # (N, OH, OW, K), 1 pass
    k = ksize * ksize * c
    a2 = patches.reshape(n * oh * (ow // 2), 2 * k)    # free relabel
    return a2, (n, oh, ow)


# ----------------------------------------------------------------------------
# Wrappers
# ----------------------------------------------------------------------------
def conv7x7_bn_relu_packed(x_nhwc, w, bias, bn, *, stride=2, pad=3):
    """Fused Conv2d(7x7, s=2, p=3) + BN(inference) + ReLU.

    Returns a lane-dense "W-packed" bf16 layout: (N, OH, OW//2, 2*Cout), with
    lanes [0:Cout] = channels at even OW, lanes [Cout:2*Cout] = odd OW.
    """
    cout, cin, kh, kw = w.shape
    # Fold BN scale into the weights; only the shift is streamed to the kernel.
    gamma, beta, mean, var, eps = bn
    scale = gamma * jax.lax.rsqrt(var + eps)
    shift = (bias - mean) * scale + beta                        # (Cout,)
    w_mat = (jnp.transpose(w, (2, 3, 1, 0)).reshape(kh * kw * cin, cout)
             * scale[None, :]).astype(jnp.bfloat16)

    a2, (n, oh, ow) = _build_packed_patches(x_nhwc.astype(jnp.bfloat16),
                                            kh, stride, pad)
    m2, k2 = a2.shape                          # k2 = 2*K (K = 147, unpadded)
    tm2 = _choose_tm(m2)
    m2p = _round_up(m2, tm2)
    if m2p != m2:                              # rare fallback only
        a2 = jnp.pad(a2, ((0, m2p - m2), (0, 0)))

    # Block-diagonal weights -> two adjacent output pixels per 128-lane row.
    zeros = jnp.zeros_like(w_mat)
    b2 = jnp.concatenate(
        [jnp.concatenate([w_mat, zeros], axis=1),
         jnp.concatenate([zeros, w_mat], axis=1)], axis=0)       # (2K, 2*Cout)
    shift2 = jnp.concatenate([shift, shift]).reshape(1, 2 * cout)
    shift2 = shift2.astype(jnp.float32)

    grid = (m2p // tm2,)
    y = pl.pallas_call(
        _conv_mm_kernel,
        out_shape=jax.ShapeDtypeStruct((m2p, 2 * cout), jnp.bfloat16),
        grid=grid,
        in_specs=[pl.BlockSpec((tm2, k2), lambda i: (i, 0)),
                  pl.BlockSpec((k2, 2 * cout), lambda i: (0, 0)),
                  pl.BlockSpec((1, 2 * cout), lambda i: (0, 0))],
        out_specs=pl.BlockSpec((tm2, 2 * cout), lambda i: (i, 0)),
        compiler_params=pltpu.CompilerParams(
            dimension_semantics=("parallel",),
            vmem_limit_bytes=32 * 1024 * 1024),
    )(a2, b2, shift2)
    return y[:m2].reshape(n, oh, ow // 2, 2 * cout)


def maxpool3x3_s2_p1_packed(y_packed):
    """MaxPool2d(3, stride=2, padding=1) reading the W-packed bf16 conv output.

    y_packed: (N, OH1, OW1//2, 2C) bf16  ->  (N, OH1//2, OW1//2, C) f32 NHWC.
    Borders are handled inside the kernel (no XLA pad pass).
    """
    n, oh1, ow2, cc = y_packed.shape
    c = cc // 2
    oh2 = oh1 // 2
    return pl.pallas_call(
        _maxpool_kernel,
        out_shape=jax.ShapeDtypeStruct((n, oh2, ow2, c), jnp.float32),
        grid=(n,),
        in_specs=[pl.BlockSpec((1, oh1, ow2, cc), lambda b: (b, 0, 0, 0))],
        out_specs=pl.BlockSpec((1, oh2, ow2, c), lambda b: (b, 0, 0, 0)),
        compiler_params=pltpu.CompilerParams(
            dimension_semantics=("parallel",),
            vmem_limit_bytes=32 * 1024 * 1024),
    )(y_packed)


def conv1_forward(params, x_nchw):
    """Forward pass of the PyTorch `Conv1` module. Input/output are NCHW."""
    x = jnp.transpose(x_nchw, (0, 2, 3, 1))              # NCHW -> NHWC
    _, h, w, _ = x.shape
    assert h % 4 == 0 and w % 4 == 0, "packed layout needs H, W divisible by 4"
    y_packed = conv7x7_bn_relu_packed(
        x, params["conv_w"], params["conv_b"], params["bn"])
    p = maxpool3x3_s2_p1_packed(y_packed)                 # (N, H//4, W//4, 64)
    return jnp.transpose(p, (0, 3, 1, 2))                 # NHWC -> NCHW


# ----------------------------------------------------------------------------
# Params + pure-JAX reference (correctness self-check)
# ----------------------------------------------------------------------------
def make_params(key):
    kw_key, kb_key = jax.random.split(key)
    fan_in = 3 * 7 * 7
    w = jax.random.normal(kw_key, (64, 3, 7, 7), jnp.float32) * (2.0 / fan_in) ** 0.5
    b = 0.01 * jax.random.normal(kb_key, (64,), jnp.float32)
    bn = (jnp.ones((64,), jnp.float32), jnp.zeros((64,), jnp.float32),
          jnp.zeros((64,), jnp.float32), jnp.ones((64,), jnp.float32), 1e-5)
    return {"conv_w": w, "conv_b": b, "bn": bn}


def _reference(params, x_nchw):
    w, b = params["conv_w"], params["conv_b"]
    gamma, beta, mean, var, eps = params["bn"]
    y = jax.lax.conv_general_dilated(
        x_nchw, w, window_strides=(2, 2), padding=((3, 3), (3, 3)),
        dimension_numbers=("NCHW", "OIHW", "NCHW"))
    y = y + b.reshape(1, -1, 1, 1)
    y = ((y - mean.reshape(1, -1, 1, 1))
         * jax.lax.rsqrt(var + eps).reshape(1, -1, 1, 1)
         * gamma.reshape(1, -1, 1, 1) + beta.reshape(1, -1, 1, 1))
    y = jnp.maximum(y, 0.0)
    return jax.lax.reduce_window(
        y, -jnp.inf, jax.lax.max,
        window_dimensions=(1, 1, 3, 3), window_strides=(1, 1, 2, 2),
        padding=((0, 0), (0, 0), (1, 1), (1, 1)))


# ----------------------------------------------------------------------------
if __name__ == "__main__":
    key = jax.random.PRNGKey(0)
    kx, kp = jax.random.split(key)
    x = jax.random.normal(kx, (2, 3, 64, 64), jnp.float32)
    params = make_params(kp)

    fwd = jax.jit(conv1_forward)
    out = fwd(params, x)
    jax.block_until_ready(out)
    assert out.shape == (2, 64, 16, 16)

    ref = _reference(params, x)
    max_err = float(jnp.max(jnp.abs(out - ref)))
    assert jnp.allclose(out, ref, atol=7e-2, rtol=7e-2), max_err

    print("KERNEL_OK")
</pallas_src>

<mosaic_0001>
module attributes {stable_mosaic.version = 11 : i64} {
  func.func @_conv_mm_kernel(%arg0: i32, %arg1: memref<256x294xbf16, #tpu.memory_space<vmem>>, %arg2: memref<294x128xbf16, #tpu.memory_space<vmem>>, %arg3: memref<1x128xf32, #tpu.memory_space<vmem>>, %arg4: memref<256x128xbf16, #tpu.memory_space<vmem>>) attributes {dimension_semantics = [#tpu.dimension_semantics<parallel>], iteration_bounds = array<i64: 4>, scalar_prefetch = 0 : i64, scratch_operands = 0 : i64, tpu.core_type = #tpu.core_type<tc>, window_params = [{transform_indices = @transform_0, window_bounds = array<i64: 256, 294>}, {pipeline_mode = #tpu.pipeline_mode<synchronous>, transform_indices = @transform_1, window_bounds = array<i64: 294, 128>}, {pipeline_mode = #tpu.pipeline_mode<synchronous>, transform_indices = @transform_2, window_bounds = array<i64: 1, 128>}, {transform_indices = @transform_3, window_bounds = array<i64: 256, 128>}]} {
    %c0 = arith.constant 0 : index
    %c0_0 = arith.constant 0 : index
    %0 = vector.load %arg1[%c0, %c0_0] : memref<256x294xbf16, #tpu.memory_space<vmem>>, vector<256x294xbf16>
    %c0_1 = arith.constant 0 : index
    %c0_2 = arith.constant 0 : index
    %1 = vector.load %arg2[%c0_1, %c0_2] : memref<294x128xbf16, #tpu.memory_space<vmem>>, vector<294x128xbf16>
    %cst = arith.constant dense<0.000000e+00> : vector<256x128xf32>
    %2 = tpu.matmul %0, %1, %cst {dimension_numbers = #tpu.dot_dimension_numbers<[1], [0], [0], [1], [0, 0, 1, 1], [], []>} : vector<256x294xbf16>, vector<294x128xbf16>, vector<256x128xf32> -> vector<256x128xf32>
    %c0_3 = arith.constant 0 : index
    %c0_4 = arith.constant 0 : index
    %3 = vector.load %arg3[%c0_3, %c0_4] : memref<1x128xf32, #tpu.memory_space<vmem>>, vector<1x128xf32>
    %4 = vector.broadcast %3 : vector<1x128xf32> to vector<256x128xf32>
    %5 = arith.addf %2, %4 : vector<256x128xf32>
    %cst_5 = arith.constant 0.000000e+00 : f32
    %6 = vector.broadcast %cst_5 : f32 to vector<256x128xf32>
    %7 = arith.maximumf %5, %6 : vector<256x128xf32>
    %8 = arith.truncf %7 : vector<256x128xf32> to vector<256x128xbf16>
    %c0_6 = arith.constant 0 : index
    %c0_7 = arith.constant 0 : index
    %9 = vector.load %arg4[%c0_6, %c0_7] : memref<256x128xbf16, #tpu.memory_space<vmem>>, vector<256x128xbf16>
    tpu.vector_store %arg4[%c0_6, %c0_7], %8 {strides = array<i32>} : memref<256x128xbf16, #tpu.memory_space<vmem>>, vector<256x128xbf16>,
    return
  }
  func.func @transform_0(%arg0: i32) -> (i32, i32) {
    %c0_i32 = arith.constant 0 : i32
    %c0_i32_0 = arith.constant 0 : i32
    return %arg0, %c0_i32 : i32, i32
  }
  func.func @transform_1(%arg0: i32) -> (i32, i32) {
    %c0_i32 = arith.constant 0 : i32
    %c0_i32_0 = arith.constant 0 : i32
    %c0_i32_1 = arith.constant 0 : i32
    return %c0_i32, %c0_i32_0 : i32, i32
  }
  func.func @transform_2(%arg0: i32) -> (i32, i32) {
    %c0_i32 = arith.constant 0 : i32
    %c0_i32_0 = arith.constant 0 : i32
    %c0_i32_1 = arith.constant 0 : i32
    return %c0_i32, %c0_i32_0 : i32, i32
  }
  func.func @transform_3(%arg0: i32) -> (i32, i32) {
    %c0_i32 = arith.constant 0 : i32
    %c0_i32_0 = arith.constant 0 : i32
    return %arg0, %c0_i32 : i32, i32
  }
}

module attributes {stable_mosaic.version = 11 : i64} {
  func.func @_maxpool_kernel(%arg0: i32, %arg1: memref<1x32x16x128xbf16, #tpu.memory_space<vmem>>, %arg2: memref<1x16x16x64xf32, #tpu.memory_space<vmem>>) attributes {dimension_semantics = [#tpu.dimension_semantics<parallel>], iteration_bounds = array<i64: 2>, scalar_prefetch = 0 : i64, scratch_operands = 0 : i64, tpu.core_type = #tpu.core_type<tc>, window_params = [{transform_indices = @transform_0, window_bounds = array<i64: 1, 32, 16, 128>}, {transform_indices = @transform_1, window_bounds = array<i64: 1, 16, 16, 64>}]} {
    %c0 = arith.constant 0 : index
    %c0_0 = arith.constant 0 : index
    %c0_1 = arith.constant 0 : index
    %c0_2 = arith.constant 0 : index
    %0 = vector.load %arg1[%c0, %c0_0, %c0_1, %c0_2] : memref<1x32x16x128xbf16, #tpu.memory_space<vmem>>, vector<1x32x16x128xbf16>
    %1 = vector.shape_cast %0 : vector<1x32x16x128xbf16> to vector<32x16x128xbf16>
    %2 = vector.shape_cast %1 : vector<32x16x128xbf16> to vector<16x2x16x128xbf16>
    %cst = arith.constant 0.000000e+00 : bf16
    %3 = vector.broadcast %cst : bf16 to vector<1x16x128xbf16>
    %4 = vector.extract_strided_slice %2 {offsets = [0, 1, 0, 0], sizes = [15, 1, 16, 128], strides = [1, 1, 1, 1]} : vector<16x2x16x128xbf16> to vector<15x1x16x128xbf16>
    %5 = vector.shape_cast %4 : vector<15x1x16x128xbf16> to vector<15x16x128xbf16>
    %6 = tpu.concatenate %3, %5 in 0 : vector<1x16x128xbf16>, vector<15x16x128xbf16> -> vector<16x16x128xbf16>
    %7 = vector.extract_strided_slice %2 {offsets = [0, 0, 0, 0], sizes = [16, 1, 16, 128], strides = [1, 1, 1, 1]} : vector<16x2x16x128xbf16> to vector<16x1x16x128xbf16>
    %8 = vector.shape_cast %7 : vector<16x1x16x128xbf16> to vector<16x16x128xbf16>
    %9 = arith.maximumf %6, %8 : vector<16x16x128xbf16>
    %10 = vector.extract_strided_slice %2 {offsets = [0, 1, 0, 0], sizes = [16, 1, 16, 128], strides = [1, 1, 1, 1]} : vector<16x2x16x128xbf16> to vector<16x1x16x128xbf16>
    %11 = vector.shape_cast %10 : vector<16x1x16x128xbf16> to vector<16x16x128xbf16>
    %12 = arith.maximumf %9, %11 : vector<16x16x128xbf16>
    %cst_3 = arith.constant 0.000000e+00 : bf16
    %13 = vector.broadcast %cst_3 : bf16 to vector<16x1x64xbf16>
    %14 = vector.extract_strided_slice %12 {offsets = [0, 0, 64], sizes = [16, 15, 64], strides = [1, 1, 1]} : vector<16x16x128xbf16> to vector<16x15x64xbf16>
    %15 = tpu.concatenate %13, %14 in 1 : vector<16x1x64xbf16>, vector<16x15x64xbf16> -> vector<16x16x64xbf16>
    %16 = vector.extract_strided_slice %12 {offsets = [0, 0, 0], sizes = [16, 16, 64], strides = [1, 1, 1]} : vector<16x16x128xbf16> to vector<16x16x64xbf16>
    %17 = arith.maximumf %15, %16 : vector<16x16x64xbf16>
    %18 = vector.extract_strided_slice %12 {offsets = [0, 0, 64], sizes = [16, 16, 64], strides = [1, 1, 1]} : vector<16x16x128xbf16> to vector<16x16x64xbf16>
    %19 = arith.maximumf %17, %18 : vector<16x16x64xbf16>
    %20 = arith.extf %19 : vector<16x16x64xbf16> to vector<16x16x64xf32>
    %c0_4 = arith.constant 0 : index
    %c0_5 = arith.constant 0 : index
    %c0_6 = arith.constant 0 : index
    %c0_7 = arith.constant 0 : index
    %21 = vector.load %arg2[%c0_4, %c0_5, %c0_6, %c0_7] : memref<1x16x16x64xf32, #tpu.memory_space<vmem>>, vector<1x16x16x64xf32>
    %22 = vector.shape_cast %21 : vector<1x16x16x64xf32> to vector<16x16x64xf32>
    %23 = vector.shape_cast %20 : vector<16x16x64xf32> to vector<1x16x16x64xf32>
    tpu.vector_store %arg2[%c0_4, %c0_5, %c0_6, %c0_7], %23 {strides = array<i32>} : memref<1x16x16x64xf32, #tpu.memory_space<vmem>>, vector<1x16x16x64xf32>,
    return
  }
  func.func @transform_0(%arg0: i32) -> (i32, i32, i32, i32) {
    %c0_i32 = arith.constant 0 : i32
    %c0_i32_0 = arith.constant 0 : i32
    %c0_i32_1 = arith.constant 0 : i32
    %c0_i32_2 = arith.constant 0 : i32
    return %arg0, %c0_i32, %c0_i32_0, %c0_i32_1 : i32, i32, i32, i32
  }
  func.func @transform_1(%arg0: i32) -> (i32, i32, i32, i32) {
    %c0_i32 = arith.constant 0 : i32
    %c0_i32_0 = arith.constant 0 : i32
    %c0_i32_1 = arith.constant 0 : i32
    %c0_i32_2 = arith.constant 0 : i32
    return %arg0, %c0_i32, %c0_i32_0, %c0_i32_1 : i32, i32, i32, i32
  }
}

</mosaic_0001>

<llo_original>
// kernel: conv1_forward.3
$region0: #{conv1_forward.3}
  #allocation0 [shape = 'u32[]', space=smem, size = 0x4, offset = 0x4, fixed_abs, tag = 'smem constant byte address 0x4 - core index']
  #allocation1 [shape = 'u32[144,128]{1,0:T(1,128)}', space=vmem, size = 0x12000, scoped, tag = 'internal scratch']
  %s0 = inlined_call_operand.vmem [shape: bf16[2,32,16,128], index: 0, kind: input, shape index: {}]
  %s1 = inlined_call_operand.hbm [shape: f32[2,16,16,64], index: 1, kind: output, shape index: {}]
  %s2 = sld [smem:[#allocation0]]
  $region37: #{conv1_forward.3} parent=0
    _
  %s4 = ssub.s32 1, %s2
  %s5 = scalar_select 0, %s4, %s2
  $region1: #{conv1_forward.3} parent=0
    #allocation2 [shape = 'u8[262144]{0}', space=vmem, size = 0x40000, scoped, tag = 'output window, operand 0']
    #allocation3 [shape = 's32[2]{0}', space=sflag, size = 0x8, scoped, tag = 'scoped memory for conv1_forward.3']
    %6 = vsyncpa [#allocation3], 0
    %s7 = scalar_lea.sflag [#allocation3], 1
    %8 = vsyncpa %s7, 0
    loop: start=0, step=1, limit=4
    $region2: #{conv1_forward.3} parent=1 // loop_pre_header
      _
    $region3: #{conv1_forward.3} parent=1 // loop_header
      %s10 = sphi 0, %s14
      %p11 = scmp.ge.s32.totalorder %s10, 4
      %s20 = sphi 0, %s22
      %s23 = sphi 0, %s20
      %s24 = sphi 0, %s23
      %s40 = sphi 0, %s24
      %s46 = sphi 0, %s48
      %s49 = sphi 0, %s46
      %s50 = sphi 0, %s49
      %s66 = sphi 0, %s50
    $region4: #{conv1_forward.3} parent=1 // loop_header_branch
      %13 = sbr.rel (%p11) target = $region8
    $region5: #{conv1_forward.3} parent=1 // loop_body
      %s15 = ssub.s32 %s10, 1
      %s16 = ssub.s32 %s10, 2
      %s17 = sadd.s32 %s10, 1
      %s18 = ssub.s32 %s10, %s17
      %p19 = scmp.eq.s32.totalorder %s18, 0
      %s21 = sadd.s32 %s20, 1
      %s22 = scalar_select %p19, %s20, %s21
      %p25 = pneg %p19
      %p26 = scmp.eq.s32.totalorder %s10, 1
      %p27 = por %p25, %p26
      %p28 = scmp.ne.s32.totalorder %s20, %s23
      %p29 = scmp.eq.s32.totalorder %s10, 0
      %p30 = por %p28, %p29
      %p31 = scmp.ne.s32.totalorder %s20, %s23
      %p32 = scmp.eq.s32.totalorder %s15, 1
      %p33 = por %p31, %p32
      %p34 = scmp.ne.s32.totalorder %s23, %s24
      %p35 = scmp.eq.s32.totalorder %s15, 0
      %p36 = por %p34, %p35
      %p37 = scmp.ne.s32.totalorder %s23, %s24
      %p38 = scmp.eq.s32.totalorder %s16, 1
      %p39 = por %p37, %p38
      %p41 = scmp.ne.s32.totalorder %s24, %s40
      %p42 = scmp.eq.s32.totalorder %s16, 0
      %p43 = por %p41, %p42
      %s44 = ssub.s32 %s10, %s17
      %p45 = scmp.eq.s32.totalorder %s44, 0
      %s47 = sadd.s32 %s46, 1
      %s48 = scalar_select %p45, %s46, %s47
      %p51 = pneg %p45
      %p52 = scmp.eq.s32.totalorder %s10, 1
      %p53 = por %p51, %p52
      %p54 = scmp.ne.s32.totalorder %s46, %s49
      %p55 = scmp.eq.s32.totalorder %s10, 0
      %p56 = por %p54, %p55
      %p57 = scmp.ne.s32.totalorder %s46, %s49
      %p58 = scmp.eq.s32.totalorder %s15, 1
      %p59 = por %p57, %p58
      %p60 = scmp.ne.s32.totalorder %s49, %s50
      %p61 = scmp.eq.s32.totalorder %s15, 0
      %p62 = por %p60, %p61
      %p63 = scmp.ne.s32.totalorder %s49, %s50
      %p64 = scmp.eq.s32.totalorder %s16, 1
      %p65 = por %p63, %p64
      %p67 = scmp.ne.s32.totalorder %s50, %s66
      %p68 = scmp.eq.s32.totalorder %s16, 0
      %p69 = por %p67, %p68
      %p70 = scmp.le.s32.totalorder 1, %s10
      %p71 = scmp.lt.s32.totalorder %s10, 3
      %p72 = pnand %p70, %p71
      %p73 = pneg %p72
      // Predicated region
      $region9: #{conv1_forward.3} parent=5 // pred_check
        _
      $region10: #{conv1_forward.3} parent=5 // pred_check_branch
        %75 = sbr.rel (%p72) target = $region12
      $region11: #{conv1_forward.3} parent=5 // pred_region
        %s76 = ssub.s32 %s10, 1
      $region12: #{conv1_forward.3} parent=5 // pred_fallthru
        _
      %p77 = scmp.lt.s32.totalorder %s10, 2
      // Predicated region
      $region13: #{conv1_forward.3} parent=5 // pred_check
        %p78 = pneg %p77
      $region14: #{conv1_forward.3} parent=5 // pred_check_branch
        %80 = sbr.rel (%p78) target = $region16
      $region15: #{conv1_forward.3} parent=5 // pred_region
        // Predicated region
        $region17: #{conv1_forward.3} parent=15 // pred_check
          %p81 = pneg %p30
        $region18: #{conv1_forward.3} parent=15 // pred_check_branch
          %83 = sbr.rel (%p81) target = $region20
        $region19: #{conv1_forward.3} parent=15 // pred_region
          %p84 = scmp.lt.s32.totalorder %s10, 1
          %s85 = scalar_select %p84, %s10, 1
          %s86 = smul.addr %s85, 64
          %s87 = smul.addr %s86, 4
          %s88 = scalar_lea.vmem %s0, %s87
        $region20: #{conv1_forward.3} parent=15 // pred_fallthru
          _
      $region16: #{conv1_forward.3} parent=5 // pred_fallthru
        _
      %p89 = scmp.le.s32.totalorder 1, %s10
      %p90 = scmp.lt.s32.totalorder %s10, 3
      %p91 = pnand %p89, %p90
      %p92 = pneg %p91
      // Predicated region
      $region21: #{conv1_forward.3} parent=5 // pred_check
        _
      $region22: #{conv1_forward.3} parent=5 // pred_check_branch
        %94 = sbr.rel (%p91) target = $region24
      $region23: #{conv1_forward.3} parent=5 // pred_region
        %s95 = ssub.s32 %s10, 1
        %p96 = scmp.lt.s32.totalorder %s15, 1
        %s97 = scalar_select %p96, %s15, 1
        %s98 = smul.addr %s97, 64
        %s99 = smul.addr %s98, 4
        %s100 = scalar_lea.vmem %s0, %s99
        %p101 = pneg %p36
        %p102 = pneg %p33
        %p103 = pneg %p62
        %p104 = pneg %p59
        %s105 = sand.u32 %s49, 1
        %s106 = scalar_lea.sflag [#allocation3], %s105
        %s107 = sand.u32 %s49, 1
        %s108 = smul.addr %s107, 256
        %s109 = scalar_lea.vmem [#allocation2], %s108
        %p110 = scmp.lt.s32.totalorder %s15, 1
        %s111 = scalar_select %p110, %s15, 1
        %s112 = smul.addr %s111, 64
        %s113 = smul.addr %s112, 4
        %s114 = scalar_lea.vmem %s0, %s113
        %v116 = vld [vmem:[%s114] sm:$0xf]
        %v117 = vld [vmem:[%s114 + $0x4] sm:$0xf]
        %v118 = vld [vmem:[%s114 + $0x8] sm:$0xf]
        %v119 = vld [vmem:[%s114 + $0xc] sm:$0xf]
        %v120 = vld [vmem:[%s114 + $0x10] sm:$0xf]
        %v121 = vld [vmem:[%s114 + $0x14] sm:$0xf]
        %v122 = vld [vmem:[%s114 + $0x18] sm:$0xf]
        %v123 = vld [vmem:[%s114 + $0x1c] sm:$0xf]
        %v124 = vld [vmem:[%s114 + $0x20] sm:$0xf]
        %v125 = vld [vmem:[%s114 + $0x24] sm:$0xf]
        %v126 = vld [vmem:[%s114 + $0x28] sm:$0xf]
        %v127 = vld [vmem:[%s114 + $0x2c] sm:$0xf]
        %v128 = vld [vmem:[%s114 + $0x30] sm:$0xf]
        %v129 = vld [vmem:[%s114 + $0x34] sm:$0xf]
        %v130 = vld [vmem:[%s114 + $0x38] sm:$0xf]
        %v131 = vld [vmem:[%s114 + $0x3c] sm:$0xf]
        %v132 = vld [vmem:[%s114 + $0x40] sm:$0xf]
        %v133 = vld [vmem:[%s114 + $0x44] sm:$0xf]
        %v134 = vld [vmem:[%s114 + $0x48] sm:$0xf]
        %v135 = vld [vmem:[%s114 + $0x4c] sm:$0xf]
        %v136 = vld [vmem:[%s114 + $0x50] sm:$0xf]
        %v137 = vld [vmem:[%s114 + $0x54] sm:$0xf]
        %v138 = vld [vmem:[%s114 + $0x58] sm:$0xf]
        %v139 = vld [vmem:[%s114 + $0x5c] sm:$0xf]
        %v140 = vld [vmem:[%s114 + $0x60] sm:$0xf]
        %v141 = vld [vmem:[%s114 + $0x64] sm:$0xf]
        %v142 = vld [vmem:[%s114 + $0x68] sm:$0xf]
        %v143 = vld [vmem:[%s114 + $0x6c] sm:$0xf]
        %v144 = vld [vmem:[%s114 + $0x70] sm:$0xf]
        %v145 = vld [vmem:[%s114 + $0x74] sm:$0xf]
        %v146 = vld [vmem:[%s114 + $0x78] sm:$0xf]
        %v147 = vld [vmem:[%s114 + $0x7c] sm:$0xf]
        %v148 = vld [vmem:[%s114 + $0x80] sm:$0xf]
        %v149 = vld [vmem:[%s114 + $0x84] sm:$0xf]
        %v150 = vld [vmem:[%s114 + $0x88] sm:$0xf]
        %v151 = vld [vmem:[%s114 + $0x8c] sm:$0xf]
        %v152 = vld [vmem:[%s114 + $0x90] sm:$0xf]
        %v153 = vld [vmem:[%s114 + $0x94] sm:$0xf]
        %v154 = vld [vmem:[%s114 + $0x98] sm:$0xf]
        %v155 = vld [vmem:[%s114 + $0x9c] sm:$0xf]
        %v156 = vld [vmem:[%s114 + $0xa0] sm:$0xf]
        %v157 = vld [vmem:[%s114 + $0xa4] sm:$0xf]
        %v158 = vld [vmem:[%s114 + $0xa8] sm:$0xf]
        %v159 = vld [vmem:[%s114 + $0xac] sm:$0xf]
        %v160 = vld [vmem:[%s114 + $0xb0] sm:$0xf]
        %v161 = vld [vmem:[%s114 + $0xb4] sm:$0xf]
        %v162 = vld [vmem:[%s114 + $0xb8] sm:$0xf]
        %v163 = vld [vmem:[%s114 + $0xbc] sm:$0xf]
        %v164 = vld [vmem:[%s114 + $0xc0] sm:$0xf]
        %v165 = vld [vmem:[%s114 + $0xc4] sm:$0xf]
        %v166 = vld [vmem:[%s114 + $0xc8] sm:$0xf]
        %v167 = vld [vmem:[%s114 + $0xcc] sm:$0xf]
        %v168 = vld [vmem:[%s114 + $0xd0] sm:$0xf]
        %v169 = vld [vmem:[%s114 + $0xd4] sm:$0xf]
        %v170 = vld [vmem:[%s114 + $0xd8] sm:$0xf]
        %v171 = vld [vmem:[%s114 + $0xdc] sm:$0xf]
        %v172 = vld [vmem:[%s114 + $0xe0] sm:$0xf]
        %v173 = vld [vmem:[%s114 + $0xe4] sm:$0xf]
        %v174 = vld [vmem:[%s114 + $0xe8] sm:$0xf]
        %v175 = vld [vmem:[%s114 + $0xec] sm:$0xf]
        %v176 = vld [vmem:[%s114 + $0xf0] sm:$0xf]
        %v177 = vld [vmem:[%s114 + $0xf4] sm:$0xf]
        %v178 = vld [vmem:[%s114 + $0xf8] sm:$0xf]
        %v179 = vld [vmem:[%s114 + $0xfc] sm:$0xf]
        %v210 = vunpack.c.l.b16 %v118
        %v211 = vunpack.c.l.b16 %v119
        %v212 = vunpack.c.l.b16 %v122
        %v213 = vunpack.c.l.b16 %v123
        %v214 = vunpack.c.l.b16 %v126
        %v215 = vunpack.c.l.b16 %v127
        %v216 = vunpack.c.l.b16 %v130
        %v217 = vunpack.c.l.b16 %v131
        %v218 = vunpack.c.l.b16 %v134
        %v219 = vunpack.c.l.b16 %v135
        %v220 = vunpack.c.l.b16 %v138
        %v221 = vunpack.c.l.b16 %v139
        %v222 = vunpack.c.l.b16 %v142
        %v223 = vunpack.c.l.b16 %v143
        %v224 = vunpack.c.l.b16 %v146
        %v225 = vunpack.c.l.b16 %v147
        %v226 = vunpack.c.l.b16 %v150
        %v227 = vunpack.c.l.b16 %v151
        %v228 = vunpack.c.l.b16 %v154
        %v229 = vunpack.c.l.b16 %v155
        %v230 = vunpack.c.l.b16 %v158
        %v231 = vunpack.c.l.b16 %v159
        %v232 = vunpack.c.l.b16 %v162
        %v233 = vunpack.c.l.b16 %v163
        %v234 = vunpack.c.l.b16 %v166
        %v235 = vunpack.c.l.b16 %v167
        %v236 = vunpack.c.l.b16 %v170
        %v237 = vunpack.c.l.b16 %v171
        %v238 = vunpack.c.l.b16 %v174
        %v239 = vunpack.c.l.b16 %v175
        %v240 = vpack.c.b16 %v211, %v210
        %v241 = vpack.c.b16 %v213, %v212
        %v242 = vpack.c.b16 %v215, %v214
        %v243 = vpack.c.b16 %v217, %v216
        %v244 = vpack.c.b16 %v219, %v218
        %v245 = vpack.c.b16 %v221, %v220
        %v246 = vpack.c.b16 %v223, %v222
        %v247 = vpack.c.b16 %v225, %v224
        %v248 = vpack.c.b16 %v227, %v226
        %v249 = vpack.c.b16 %v229, %v228
        %v250 = vpack.c.b16 %v231, %v230
        %v251 = vpack.c.b16 %v233, %v232
        %v252 = vpack.c.b16 %v235, %v234
        %v253 = vpack.c.b16 %v237, %v236
        %v254 = vpack.c.b16 %v239, %v238
        %v302 = vunpack.c.l.b16 %v116
        %v303 = vunpack.c.l.b16 %v117
        %v304 = vunpack.c.l.b16 %v120
        %v305 = vunpack.c.l.b16 %v121
        %v306 = vunpack.c.l.b16 %v124
        %v307 = vunpack.c.l.b16 %v125
        %v308 = vunpack.c.l.b16 %v128
        %v309 = vunpack.c.l.b16 %v129
        %v310 = vunpack.c.l.b16 %v132
        %v311 = vunpack.c.l.b16 %v133
        %v312 = vunpack.c.l.b16 %v136
        %v313 = vunpack.c.l.b16 %v137
        %v314 = vunpack.c.l.b16 %v140
        %v315 = vunpack.c.l.b16 %v141
        %v316 = vunpack.c.l.b16 %v144
        %v317 = vunpack.c.l.b16 %v145
        %v318 = vunpack.c.l.b16 %v148
        %v319 = vunpack.c.l.b16 %v149
        %v320 = vunpack.c.l.b16 %v152
        %v321 = vunpack.c.l.b16 %v153
        %v322 = vunpack.c.l.b16 %v156
        %v323 = vunpack.c.l.b16 %v157
        %v324 = vunpack.c.l.b16 %v160
        %v325 = vunpack.c.l.b16 %v161
        %v326 = vunpack.c.l.b16 %v164
        %v327 = vunpack.c.l.b16 %v165
        %v328 = vunpack.c.l.b16 %v168
        %v329 = vunpack.c.l.b16 %v169
        %v330 = vunpack.c.l.b16 %v172
        %v331 = vunpack.c.l.b16 %v173
        %v332 = vunpack.c.l.b16 %v176
        %v333 = vunpack.c.l.b16 %v177
        %v334 = vpack.c.b16 %v303, %v302
        %v335 = vpack.c.b16 %v305, %v304
        %v336 = vpack.c.b16 %v307, %v306
        %v337 = vpack.c.b16 %v309, %v308
        %v338 = vpack.c.b16 %v311, %v310
        %v339 = vpack.c.b16 %v313, %v312
        %v340 = vpack.c.b16 %v315, %v314
        %v341 = vpack.c.b16 %v317, %v316
        %v342 = vpack.c.b16 %v319, %v318
        %v343 = vpack.c.b16 %v321, %v320
        %v344 = vpack.c.b16 %v323, %v322
        %v345 = vpack.c.b16 %v325, %v324
        %v346 = vpack.c.b16 %v327, %v326
        %v347 = vpack.c.b16 %v329, %v328
        %v348 = vpack.c.b16 %v331, %v330
        %v349 = vpack.c.b16 %v333, %v332
        %v366 = vmax.bf16 %v334, 0
        %v367 = vmax.bf16 %v240, %v335
        %v368 = vmax.bf16 %v241, %v336
        %v369 = vmax.bf16 %v242, %v337
        %v370 = vmax.bf16 %v243, %v338
        %v371 = vmax.bf16 %v244, %v339
        %v372 = vmax.bf16 %v245, %v340
        %v373 = vmax.bf16 %v246, %v341
        %v374 = vmax.bf16 %v247, %v342
        %v375 = vmax.bf16 %v248, %v343
        %v376 = vmax.bf16 %v249, %v344
        %v377 = vmax.bf16 %v250, %v345
        %v378 = vmax.bf16 %v251, %v346
        %v379 = vmax.bf16 %v252, %v347
        %v380 = vmax.bf16 %v253, %v348
        %v381 = vmax.bf16 %v254, %v349
        %v384 = vunpack.c.l.b16 %v178
        %v385 = vunpack.c.l.b16 %v179
        %v386 = vpack.c.b16 %v385, %v384
        %v388 = vmax.bf16 %v366, %v240
        %v389 = vmax.bf16 %v367, %v241
        %v390 = vmax.bf16 %v368, %v242
        %v391 = vmax.bf16 %v369, %v243
        %v392 = vmax.bf16 %v370, %v244
        %v393 = vmax.bf16 %v371, %v245
        %v394 = vmax.bf16 %v372, %v246
        %v395 = vmax.bf16 %v373, %v247
        %v396 = vmax.bf16 %v374, %v248
        %v397 = vmax.bf16 %v375, %v249
        %v398 = vmax.bf16 %v376, %v250
        %v399 = vmax.bf16 %v377, %v251
        %v400 = vmax.bf16 %v378, %v252
        %v401 = vmax.bf16 %v379, %v253
        %v402 = vmax.bf16 %v380, %v254
        %v403 = vmax.bf16 %v381, %v386
        %v405 = vshrl.u32 %v388, 16
        %v407 = vrot.slane %v405, 7
        %v408 = vshll.u32 %v388, 16
        %v410 = vor.u32 %v407, %v408
        %v412 = vshrl.u32 %v389, 16
        %v414 = vrot.slane %v412, 7
        %v415 = vshll.u32 %v389, 16
        %v417 = vor.u32 %v414, %v415
        %v419 = vshrl.u32 %v390, 16
        %v421 = vrot.slane %v419, 7
        %v422 = vshll.u32 %v390, 16
        %v424 = vor.u32 %v421, %v422
        %v426 = vshrl.u32 %v391, 16
        %v428 = vrot.slane %v426, 7
        %v429 = vshll.u32 %v391, 16
        %v431 = vor.u32 %v428, %v429
        %v433 = vshrl.u32 %v392, 16
        %v435 = vrot.slane %v433, 7
        %v436 = vshll.u32 %v392, 16
        %v438 = vor.u32 %v435, %v436
        %v440 = vshrl.u32 %v393, 16
        %v442 = vrot.slane %v440, 7
        %v443 = vshll.u32 %v393, 16
        %v445 = vor.u32 %v442, %v443
        %v447 = vshrl.u32 %v394, 16
        %v449 = vrot.slane %v447, 7
        %v450 = vshll.u32 %v394, 16
        %v452 = vor.u32 %v449, %v450
        %v454 = vshrl.u32 %v395, 16
        %v456 = vrot.slane %v454, 7
        %v457 = vshll.u32 %v395, 16
        %v459 = vor.u32 %v456, %v457
        %v461 = vshrl.u32 %v396, 16
        %v463 = vrot.slane %v461, 7
        %v464 = vshll.u32 %v396, 16
        %v466 = vor.u32 %v463, %v464
        %v468 = vshrl.u32 %v397, 16
        %v470 = vrot.slane %v468, 7
        %v471 = vshll.u32 %v397, 16
        %v473 = vor.u32 %v470, %v471
        %v475 = vshrl.u32 %v398, 16
        %v477 = vrot.slane %v475, 7
        %v478 = vshll.u32 %v398, 16
        %v480 = vor.u32 %v477, %v478
        %v482 = vshrl.u32 %v399, 16
        %v484 = vrot.slane %v482, 7
        %v485 = vshll.u32 %v399, 16
        %v487 = vor.u32 %v484, %v485
        %v489 = vshrl.u32 %v400, 16
        %v491 = vrot.slane %v489, 7
        %v492 = vshll.u32 %v400, 16
        %v494 = vor.u32 %v491, %v492
        %v496 = vshrl.u32 %v401, 16
        %v498 = vrot.slane %v496, 7
        %v499 = vshll.u32 %v401, 16
        %v501 = vor.u32 %v498, %v499
        %v503 = vshrl.u32 %v402, 16
        %v505 = vrot.slane %v503, 7
        %v506 = vshll.u32 %v402, 16
        %v508 = vor.u32 %v505, %v506
        %v510 = vshrl.u32 %v403, 16
        %v512 = vrot.slane %v510, 7
        %v513 = vshll.u32 %v403, 16
        %v515 = vor.u32 %v512, %v513
        %516 = vrot.lane.b32.xlu0 %v410, 64
        %v517 = vpop.permute.xlu0 %516
        %518 = vrot.lane.b32.xlu0 %v417, 64
        %v519 = vpop.permute.xlu0 %518
        %520 = vrot.lane.b32.xlu0 %v424, 64
        %v521 = vpop.permute.xlu0 %520
        %522 = vrot.lane.b32.xlu0 %v431, 64
        %v523 = vpop.permute.xlu0 %522
        %524 = vrot.lane.b32.xlu0 %v438, 64
        %v525 = vpop.permute.xlu0 %524
        %526 = vrot.lane.b32.xlu0 %v445, 64
        %v527 = vpop.permute.xlu0 %526
        %528 = vrot.lane.b32.xlu0 %v452, 64
        %v529 = vpop.permute.xlu0 %528
        %530 = vrot.lane.b32.xlu0 %v459, 64
        %v531 = vpop.permute.xlu0 %530
        %532 = vrot.lane.b32.xlu0 %v466, 64
        %v533 = vpop.permute.xlu0 %532
        %534 = vrot.lane.b32.xlu0 %v473, 64
        %v535 = vpop.permute.xlu0 %534
        %536 = vrot.lane.b32.xlu0 %v480, 64
        %v537 = vpop.permute.xlu0 %536
        %538 = vrot.lane.b32.xlu0 %v487, 64
        %v539 = vpop.permute.xlu0 %538
        %540 = vrot.lane.b32.xlu0 %v494, 64
        %v541 = vpop.permute.xlu0 %540
        %542 = vrot.lane.b32.xlu0 %v501, 64
        %v543 = vpop.permute.xlu0 %542
        %544 = vrot.lane.b32.xlu0 %v508, 64
        %v545 = vpop.permute.xlu0 %544
        %546 = vrot.lane.b32.xlu0 %v515, 64
        %v547 = vpop.permute.xlu0 %546
        %vm564 = vcmask 1040384
        %vm565 = vsmask.f32 256
        %vm566 = vmand %vm564, %vm565
        %v567 = vsel %vm566, 0, %v517
        %v568 = vsel %vm566, 0, %v519
        %v569 = vsel %vm566, 0, %v521
        %v570 = vsel %vm566, 0, %v523
        %v571 = vsel %vm566, 0, %v525
        %v572 = vsel %vm566, 0, %v527
        %v573 = vsel %vm566, 0, %v529
        %v574 = vsel %vm566, 0, %v531
        %v575 = vsel %vm566, 0, %v533
        %v576 = vsel %vm566, 0, %v535
        %v577 = vsel %vm566, 0, %v537
        %v578 = vsel %vm566, 0, %v539
        %v579 = vsel %vm566, 0, %v541
        %v580 = vsel %vm566, 0, %v543
        %v581 = vsel %vm566, 0, %v545
        %v582 = vsel %vm566, 0, %v547
        %v583 = vmax.bf16 %v567, %v388
        %v584 = vmax.bf16 %v568, %v389
        %v585 = vmax.bf16 %v569, %v390
        %v586 = vmax.bf16 %v570, %v391
        %v587 = vmax.bf16 %v571, %v392
        %v588 = vmax.bf16 %v572, %v393
        %v589 = vmax.bf16 %v573, %v394
        %v590 = vmax.bf16 %v574, %v395
        %v591 = vmax.bf16 %v575, %v396
        %v592 = vmax.bf16 %v576, %v397
        %v593 = vmax.bf16 %v577, %v398
        %v594 = vmax.bf16 %v578, %v399
        %v595 = vmax.bf16 %v579, %v400
        %v596 = vmax.bf16 %v580, %v401
        %v597 = vmax.bf16 %v581, %v402
        %v598 = vmax.bf16 %v582, %v403
        %615 = vrot.lane.b32.xlu0 %v388, 64
        %v616 = vpop.permute.xlu0 %615
        %617 = vrot.lane.b32.xlu0 %v389, 64
        %v618 = vpop.permute.xlu0 %617
        %619 = vrot.lane.b32.xlu0 %v390, 64
        %v620 = vpop.permute.xlu0 %619
        %621 = vrot.lane.b32.xlu0 %v391, 64
        %v622 = vpop.permute.xlu0 %621
        %623 = vrot.lane.b32.xlu0 %v392, 64
        %v624 = vpop.permute.xlu0 %623
        %625 = vrot.lane.b32.xlu0 %v393, 64
        %v626 = vpop.permute.xlu0 %625
        %627 = vrot.lane.b32.xlu0 %v394, 64
        %v628 = vpop.permute.xlu0 %627
        %629 = vrot.lane.b32.xlu0 %v395, 64
        %v630 = vpop.permute.xlu0 %629
        %631 = vrot.lane.b32.xlu0 %v396, 64
        %v632 = vpop.permute.xlu0 %631
        %633 = vrot.lane.b32.xlu0 %v397, 64
        %v634 = vpop.permute.xlu0 %633
        %635 = vrot.lane.b32.xlu0 %v398, 64
        %v636 = vpop.permute.xlu0 %635
        %637 = vrot.lane.b32.xlu0 %v399, 64
        %v638 = vpop.permute.xlu0 %637
        %639 = vrot.lane.b32.xlu0 %v400, 64
        %v640 = vpop.permute.xlu0 %639
        %641 = vrot.lane.b32.xlu0 %v401, 64
        %v642 = vpop.permute.xlu0 %641
        %643 = vrot.lane.b32.xlu0 %v402, 64
        %v644 = vpop.permute.xlu0 %643
        %645 = vrot.lane.b32.xlu0 %v403, 64
        %v646 = vpop.permute.xlu0 %645
        %v663 = vmax.bf16 %v583, %v616
        %v664 = vmax.bf16 %v584, %v618
        %v665 = vmax.bf16 %v585, %v620
        %v666 = vmax.bf16 %v586, %v622
        %v667 = vmax.bf16 %v587, %v624
        %v668 = vmax.bf16 %v588, %v626
        %v669 = vmax.bf16 %v589, %v628
        %v670 = vmax.bf16 %v590, %v630
        %v671 = vmax.bf16 %v591, %v632
        %v672 = vmax.bf16 %v592, %v634
        %v673 = vmax.bf16 %v593, %v636
        %v674 = vmax.bf16 %v594, %v638
        %v675 = vmax.bf16 %v595, %v640
        %v676 = vmax.bf16 %v596, %v642
        %v677 = vmax.bf16 %v597, %v644
        %v678 = vmax.bf16 %v598, %v646
        %v679 = vunpack.c.l.bf16 %v663
        %v680 = vunpack.c.h.bf16 %v663
        %v681 = vunpack.c.l.bf16 %v664
        %v682 = vunpack.c.h.bf16 %v664
        %v683 = vunpack.c.l.bf16 %v665
        %v684 = vunpack.c.h.bf16 %v665
        %v685 = vunpack.c.l.bf16 %v666
        %v686 = vunpack.c.h.bf16 %v666
        %v687 = vunpack.c.l.bf16 %v667
        %v688 = vunpack.c.h.bf16 %v667
        %v689 = vunpack.c.l.bf16 %v668
        %v690 = vunpack.c.h.bf16 %v668
        %v691 = vunpack.c.l.bf16 %v669
        %v692 = vunpack.c.h.bf16 %v669
        %v693 = vunpack.c.l.bf16 %v670
        %v694 = vunpack.c.h.bf16 %v670
        %v695 = vunpack.c.l.bf16 %v671
        %v696 = vunpack.c.h.bf16 %v671
        %v697 = vunpack.c.l.bf16 %v672
        %v698 = vunpack.c.h.bf16 %v672
        %v699 = vunpack.c.l.bf16 %v673
        %v700 = vunpack.c.h.bf16 %v673
        %v701 = vunpack.c.l.bf16 %v674
        %v702 = vunpack.c.h.bf16 %v674
        %v703 = vunpack.c.l.bf16 %v675
        %v704 = vunpack.c.h.bf16 %v675
        %v705 = vunpack.c.l.bf16 %v676
        %v706 = vunpack.c.h.bf16 %v676
        %v707 = vunpack.c.l.bf16 %v677
        %v708 = vunpack.c.h.bf16 %v677
        %v709 = vunpack.c.l.bf16 %v678
        %v710 = vunpack.c.h.bf16 %v678
        %vm711 = vcmask 523264
        %712 = vst.msk [vmem:[%s109] sm:$0xff] %vm711, %v679
        %713 = vst.msk [vmem:[%s109 + $0x8] sm:$0xff] %vm711, %v680
        %714 = vst.msk [vmem:[%s109 + $0x10] sm:$0xff] %vm711, %v681
        %715 = vst.msk [vmem:[%s109 + $0x18] sm:$0xff] %vm711, %v682
        %716 = vst.msk [vmem:[%s109 + $0x20] sm:$0xff] %vm711, %v683
        %717 = vst.msk [vmem:[%s109 + $0x28] sm:$0xff] %vm711, %v684
        %718 = vst.msk [vmem:[%s109 + $0x30] sm:$0xff] %vm711, %v685
        %719 = vst.msk [vmem:[%s109 + $0x38] sm:$0xff] %vm711, %v686
        %720 = vst.msk [vmem:[%s109 + $0x40] sm:$0xff] %vm711, %v687
        %721 = vst.msk [vmem:[%s109 + $0x48] sm:$0xff] %vm711, %v688
        %722 = vst.msk [vmem:[%s109 + $0x50] sm:$0xff] %vm711, %v689
        %723 = vst.msk [vmem:[%s109 + $0x58] sm:$0xff] %vm711, %v690
        %724 = vst.msk [vmem:[%s109 + $0x60] sm:$0xff] %vm711, %v691
        %725 = vst.msk [vmem:[%s109 + $0x68] sm:$0xff] %vm711, %v692
        %726 = vst.msk [vmem:[%s109 + $0x70] sm:$0xff] %vm711, %v693
        %727 = vst.msk [vmem:[%s109 + $0x78] sm:$0xff] %vm711, %v694
        %728 = vst.msk [vmem:[%s109 + $0x80] sm:$0xff] %vm711, %v695
        %729 = vst.msk [vmem:[%s109 + $0x88] sm:$0xff] %vm711, %v696
        %730 = vst.msk [vmem:[%s109 + $0x90] sm:$0xff] %vm711, %v697
        %731 = vst.msk [vmem:[%s109 + $0x98] sm:$0xff] %vm711, %v698
        %732 = vst.msk [vmem:[%s109 + $0xa0] sm:$0xff] %vm711, %v699
        %733 = vst.msk [vmem:[%s109 + $0xa8] sm:$0xff] %vm711, %v700
        %734 = vst.msk [vmem:[%s109 + $0xb0] sm:$0xff] %vm711, %v701
        %735 = vst.msk [vmem:[%s109 + $0xb8] sm:$0xff] %vm711, %v702
        %736 = vst.msk [vmem:[%s109 + $0xc0] sm:$0xff] %vm711, %v703
        %737 = vst.msk [vmem:[%s109 + $0xc8] sm:$0xff] %vm711, %v704
        %738 = vst.msk [vmem:[%s109 + $0xd0] sm:$0xff] %vm711, %v705
        %739 = vst.msk [vmem:[%s109 + $0xd8] sm:$0xff] %vm711, %v706
        %740 = vst.msk [vmem:[%s109 + $0xe0] sm:$0xff] %vm711, %v707
        %741 = vst.msk [vmem:[%s109 + $0xe8] sm:$0xff] %vm711, %v708
        %742 = vst.msk [vmem:[%s109 + $0xf0] sm:$0xff] %vm711, %v709
        %743 = vst.msk [vmem:[%s109 + $0xf8] sm:$0xff] %vm711, %v710
        %s744 = sand.u32 %s49, 1
        %s745 = scalar_lea.sflag [#allocation3], %s744
        %s746 = sand.u32 %s49, 1
        %s747 = smul.addr %s746, 256
        %s748 = scalar_lea.vmem [#allocation2], %s747
        // Predicated region
        $region25: #{conv1_forward.3} parent=23 // pred_check
          %p749 = pneg %p59
        $region26: #{conv1_forward.3} parent=23 // pred_check_branch
          %751 = sbr.rel (%p749) target = $region28
        $region27: #{conv1_forward.3} parent=23 // pred_region
          %s753 = ssub.s32 4096, 4096
          %754 = vsyncadd %s745, %s753
          %s755 = smul.addr %s15, 32
          %s756 = smul.addr %s755, 128
          %s757 = scalar_lea.hbm %s1, %s756
          %s758 = sshll.u32 %s748, 4
          %s759 = int_to_ptr.vmem [resolvable:$true] %s758
          %764 = dma.vmem_to_hbm [thread:$0]  %s759, 4096, %s757, %s745, 128, 128, 8
        $region28: #{conv1_forward.3} parent=23 // pred_fallthru
          _
      $region24: #{conv1_forward.3} parent=5 // pred_fallthru
        _
      %p765 = scmp.le.s32.totalorder 2, %s10
      // Predicated region
      $region29: #{conv1_forward.3} parent=5 // pred_check
        %p766 = pneg %p765
      $region30: #{conv1_forward.3} parent=5 // pred_check_branch
        %768 = sbr.rel (%p766) target = $region32
      $region31: #{conv1_forward.3} parent=5 // pred_region
        %s769 = ssub.s32 %s10, 2
        // Predicated region
        $region33: #{conv1_forward.3} parent=31 // pred_check
          %p770 = pneg %p65
        $region34: #{conv1_forward.3} parent=31 // pred_check_branch
          %772 = sbr.rel (%p770) target = $region36
        $region35: #{conv1_forward.3} parent=31 // pred_region
          %s773 = sand.u32 %s50, 1
          %s774 = scalar_lea.sflag [#allocation3], %s773
          %s775 = sand.u32 %s50, 1
          %s776 = smul.addr %s775, 256
          %s777 = scalar_lea.vmem [#allocation2], %s776
          %778 = dma.done %s774, 4096
        $region36: #{conv1_forward.3} parent=31 // pred_fallthru
          _
      $region32: #{conv1_forward.3} parent=5 // pred_fallthru
        _
    $region6: #{conv1_forward.3} parent=1 // loop_footer
      %s14 = sadd.s32 1, %s10
    $region7: #{conv1_forward.3} parent=1 // loop_footer_branch
      %9 = sbr.rel target = $region3
    $region8: #{conv1_forward.3} parent=1 // loop_exit
      _
    %779 = vsyncpa [#allocation3], 1
    %s780 = scalar_lea.sflag [#allocation3], 1
    %781 = vsyncpa %s780, 1

// kernel: conv1_forward.2
$region0: #{conv1_forward.2}
  #allocation0 [shape = 'u32[]', space=smem, size = 0x4, offset = 0x4, fixed_abs, tag = 'smem constant byte address 0x4 - core index']
  #allocation1 [shape = 'u32[144,128]{1,0:T(1,128)}', space=vmem, size = 0x12000, scoped, tag = 'internal scratch']
  %s0 = inlined_call_operand.vmem [shape: bf16[1024,294], index: 0, kind: input, shape index: {}]
  %s1 = inlined_call_operand.vmem [shape: bf16[294,128], index: 1, kind: input, shape index: {}]
  %s2 = inlined_call_operand.vmem [shape: f32[1,128], index: 2, kind: input, shape index: {}]
  %s3 = inlined_call_operand.vmem [shape: bf16[1024,128], index: 3, kind: output, shape index: {}]
  %s4 = sld [smem:[#allocation0]]
  $region45: #{conv1_forward.2} parent=0
    _
  %s6 = ssub.s32 1, %s4
  %s7 = scalar_select 0, %s6, %s4
  loop: start=0, step=1, limit=6
  $region2: #{conv1_forward.2} parent=0 // loop_pre_header
    _
  $region3: #{conv1_forward.2} parent=0 // loop_header
    %s9 = sphi 0, %s13
    %p10 = scmp.ge.s32.totalorder %s9, 6
    %s19 = sphi 0, %s21
    %s22 = sphi 0, %s19
    %s23 = sphi 0, %s22
    %s39 = sphi 0, %s23
    %s43 = sphi 0, %s43
    %s45 = sphi 0, %s43
    %s46 = sphi 0, %s45
    %s60 = sphi 0, %s46
    %s64 = sphi 0, %s64
    %s66 = sphi 0, %s64
    %s67 = sphi 0, %s66
    %s81 = sphi 0, %s67
    %s87 = sphi 0, %s89
    %s90 = sphi 0, %s87
    %s91 = sphi 0, %s90
    %s107 = sphi 0, %s91
  $region4: #{conv1_forward.2} parent=0 // loop_header_branch
    %12 = sbr.rel (%p10) target = $region8
  $region5: #{conv1_forward.2} parent=0 // loop_body
    %s14 = ssub.s32 %s9, 1
    %s15 = ssub.s32 %s9, 2
    %s16 = sadd.s32 %s9, 1
    %s17 = ssub.s32 %s9, %s16
    %p18 = scmp.eq.s32.totalorder %s17, 0
    %s20 = sadd.s32 %s19, 1
    %s21 = scalar_select %p18, %s19, %s20
    %p24 = pneg %p18
    %p25 = scmp.eq.s32.totalorder %s9, 3
    %p26 = por %p24, %p25
    %p27 = scmp.ne.s32.totalorder %s19, %s22
    %p28 = scmp.eq.s32.totalorder %s9, 0
    %p29 = por %p27, %p28
    %p30 = scmp.ne.s32.totalorder %s19, %s22
    %p31 = scmp.eq.s32.totalorder %s14, 3
    %p32 = por %p30, %p31
    %p33 = scmp.ne.s32.totalorder %s22, %s23
    %p34 = scmp.eq.s32.totalorder %s14, 0
    %p35 = por %p33, %p34
    %p36 = scmp.ne.s32.totalorder %s22, %s23
    %p37 = scmp.eq.s32.totalorder %s15, 3
    %p38 = por %p36, %p37
    %p40 = scmp.ne.s32.totalorder %s23, %s39
    %p41 = scmp.eq.s32.totalorder %s15, 0
    %p42 = por %p40, %p41
    %s44 = sadd.s32 %s43, 1
    %p47 = scmp.eq.s32.totalorder %s9, 3
    %p48 = scmp.ne.s32.totalorder %s43, %s45
    %p49 = scmp.eq.s32.totalorder %s9, 0
    %p50 = por %p48, %p49
    %p51 = scmp.ne.s32.totalorder %s43, %s45
    %p52 = scmp.eq.s32.totalorder %s14, 3
    %p53 = por %p51, %p52
    %p54 = scmp.ne.s32.totalorder %s45, %s46
    %p55 = scmp.eq.s32.totalorder %s14, 0
    %p56 = por %p54, %p55
    %p57 = scmp.ne.s32.totalorder %s45, %s46
    %p58 = scmp.eq.s32.totalorder %s15, 3
    %p59 = por %p57, %p58
    %p61 = scmp.ne.s32.totalorder %s46, %s60
    %p62 = scmp.eq.s32.totalorder %s15, 0
    %p63 = por %p61, %p62
    %s65 = sadd.s32 %s64, 1
    %p68 = scmp.eq.s32.totalorder %s9, 3
    %p69 = scmp.ne.s32.totalorder %s64, %s66
    %p70 = scmp.eq.s32.totalorder %s9, 0
    %p71 = por %p69, %p70
    %p72 = scmp.ne.s32.totalorder %s64, %s66
    %p73 = scmp.eq.s32.totalorder %s14, 3
    %p74 = por %p72, %p73
    %p75 = scmp.ne.s32.totalorder %s66, %s67
    %p76 = scmp.eq.s32.totalorder %s14, 0
    %p77 = por %p75, %p76
    %p78 = scmp.ne.s32.totalorder %s66, %s67
    %p79 = scmp.eq.s32.totalorder %s15, 3
    %p80 = por %p78, %p79
    %p82 = scmp.ne.s32.totalorder %s67, %s81
    %p83 = scmp.eq.s32.totalorder %s15, 0
    %p84 = por %p82, %p83
    %s85 = ssub.s32 %s9, %s16
    %p86 = scmp.eq.s32.totalorder %s85, 0
    %s88 = sadd.s32 %s87, 1
    %s89 = scalar_select %p86, %s87, %s88
    %p92 = pneg %p86
    %p93 = scmp.eq.s32.totalorder %s9, 3
    %p94 = por %p92, %p93
    %p95 = scmp.ne.s32.totalorder %s87, %s90
    %p96 = scmp.eq.s32.totalorder %s9, 0
    %p97 = por %p95, %p96
    %p98 = scmp.ne.s32.totalorder %s87, %s90
    %p99 = scmp.eq.s32.totalorder %s14, 3
    %p100 = por %p98, %p99
    %p101 = scmp.ne.s32.totalorder %s90, %s91
    %p102 = scmp.eq.s32.totalorder %s14, 0
    %p103 = por %p101, %p102
    %p104 = scmp.ne.s32.totalorder %s90, %s91
    %p105 = scmp.eq.s32.totalorder %s15, 3
    %p106 = por %p104, %p105
    %p108 = scmp.ne.s32.totalorder %s91, %s107
    %p109 = scmp.eq.s32.totalorder %s15, 0
    %p110 = por %p108, %p109
    %p111 = scmp.le.s32.totalorder 1, %s9
    %p112 = scmp.lt.s32.totalorder %s9, 5
    %p113 = pnand %p111, %p112
    %p114 = pneg %p113
    // Predicated region
    $region9: #{conv1_forward.2} parent=5 // pred_check
      _
    $region10: #{conv1_forward.2} parent=5 // pred_check_branch
      %116 = sbr.rel (%p113) target = $region12
    $region11: #{conv1_forward.2} parent=5 // pred_region
      %s117 = ssub.s32 %s9, 1
      // Predicated region
      $region13: #{conv1_forward.2} parent=11 // pred_check
        %p118 = pneg %p56
      $region14: #{conv1_forward.2} parent=11 // pred_check_branch
        %120 = sbr.rel (%p118) target = $region16
      $region15: #{conv1_forward.2} parent=11 // pred_region
        _
      $region16: #{conv1_forward.2} parent=11 // pred_fallthru
        _
      // Predicated region
      $region17: #{conv1_forward.2} parent=11 // pred_check
        %p121 = pneg %p77
      $region18: #{conv1_forward.2} parent=11 // pred_check_branch
        %123 = sbr.rel (%p121) target = $region20
      $region19: #{conv1_forward.2} parent=11 // pred_region
        _
      $region20: #{conv1_forward.2} parent=11 // pred_fallthru
        _
    $region12: #{conv1_forward.2} parent=5 // pred_fallthru
      _
    %p124 = scmp.lt.s32.totalorder %s9, 4
    // Predicated region
    $region21: #{conv1_forward.2} parent=5 // pred_check
      %p125 = pneg %p124
    $region22: #{conv1_forward.2} parent=5 // pred_check_branch
      %127 = sbr.rel (%p125) target = $region24
    $region23: #{conv1_forward.2} parent=5 // pred_region
      // Predicated region
      $region25: #{conv1_forward.2} parent=23 // pred_check
        %p128 = pneg %p29
      $region26: #{conv1_forward.2} parent=23 // pred_check_branch
        %130 = sbr.rel (%p128) target = $region28
      $region27: #{conv1_forward.2} parent=23 // pred_region
        %s131 = smul.u32 32, %s9
        %p132 = scmp.lt.s32.totalorder %s131, 127
        %s133 = scalar_select %p132, %s131, 127
        %s134 = smul.addr %s133, 3
        %s135 = smul.addr %s134, 4
        %s136 = scalar_lea.vmem %s0, %s135
        %s137 = smul.u32 32, %s9
      $region28: #{conv1_forward.2} parent=23 // pred_fallthru
        _
    $region24: #{conv1_forward.2} parent=5 // pred_fallthru
      _
    %p138 = scmp.le.s32.totalorder 1, %s9
    %p139 = scmp.lt.s32.totalorder %s9, 5
    %p140 = pnand %p138, %p139
    %p141 = pneg %p140
    // Predicated region
    $region29: #{conv1_forward.2} parent=5 // pred_check
      _
    $region30: #{conv1_forward.2} parent=5 // pred_check_branch
      %143 = sbr.rel (%p140) target = $region32
    $region31: #{conv1_forward.2} parent=5 // pred_region
      %s144 = ssub.s32 %s9, 1
      %s145 = smul.u32 32, %s14
      %p146 = scmp.lt.s32.totalorder %s145, 127
      %s147 = scalar_select %p146, %s145, 127
      %s148 = smul.addr %s147, 3
      %s149 = smul.addr %s148, 4
      %s150 = scalar_lea.vmem %s0, %s149
      %p151 = pneg %p35
      %p152 = pneg %p32
      %p153 = pneg %p56
      %p154 = pneg %p53
      %p155 = pneg %p77
      %p156 = pneg %p74
      %p157 = pneg %p103
      %p158 = pneg %p100
      %s159 = smul.u32 32, %s14
      %p160 = scmp.lt.s32.totalorder %s159, 127
      %s161 = scalar_select %p160, %s159, 127
      %s162 = smul.addr %s161, 4
      %s163 = scalar_lea.vmem %s3, %s162
      %s164 = smul.u32 32, %s14
      %p165 = scmp.lt.s32.totalorder %s164, 127
      %s166 = scalar_select %p165, %s164, 127
      %s167 = smul.addr %s166, 3
      %s168 = smul.addr %s167, 4
      %s169 = scalar_lea.vmem %s0, %s168
      %s170 = smul.u32 32, %s14
      %s171 = smul.u32 32, %s14
      %p172 = scmp.lt.s32.totalorder %s171, 127
      %s173 = scalar_select %p172, %s171, 127
      %s174 = smul.addr %s173, 4
      %s175 = scalar_lea.vmem %s3, %s174
      %s176 = smul.u32 32, %s14
      %v178 = vld [vmem:[%s169] sm:$0xff]
      %v179 = vld [vmem:[%s169 + $0x8] sm:$0xf]
      %v180 = vld [vmem:[%s169 + $0xc] sm:$0xff]
      %v181 = vld [vmem:[%s169 + $0x14] sm:$0xf]
      %v182 = vld [vmem:[%s169 + $0x18] sm:$0xff]
      %v183 = vld [vmem:[%s169 + $0x20] sm:$0xf]
      %v184 = vld [vmem:[%s169 + $0x24] sm:$0xff]
      %v185 = vld [vmem:[%s169 + $0x2c] sm:$0xf]
      %v186 = vld [vmem:[%s169 + $0x30] sm:$0xff]
      %v187 = vld [vmem:[%s169 + $0x38] sm:$0xf]
      %v188 = vld [vmem:[%s169 + $0x3c] sm:$0xff]
      %v189 = vld [vmem:[%s169 + $0x44] sm:$0xf]
      %v190 = vld [vmem:[%s169 + $0x48] sm:$0xff]
      %v191 = vld [vmem:[%s169 + $0x50] sm:$0xf]
      %v192 = vld [vmem:[%s169 + $0x54] sm:$0xff]
      %v193 = vld [vmem:[%s169 + $0x5c] sm:$0xf]
      %v194 = vld [vmem:[%s169 + $0x60] sm:$0xff]
      %v195 = vld [vmem:[%s169 + $0x68] sm:$0xf]
      %v196 = vld [vmem:[%s169 + $0x6c] sm:$0xff]
      %v197 = vld [vmem:[%s169 + $0x74] sm:$0xf]
      %v198 = vld [vmem:[%s169 + $0x78] sm:$0xff]
      %v199 = vld [vmem:[%s169 + $0x80] sm:$0xf]
      %v200 = vld [vmem:[%s169 + $0x84] sm:$0xff]
      %v201 = vld [vmem:[%s169 + $0x8c] sm:$0xf]
      %v202 = vld [vmem:[%s169 + $0x90] sm:$0xff]
      %v203 = vld [vmem:[%s169 + $0x98] sm:$0xf]
      %v204 = vld [vmem:[%s169 + $0x9c] sm:$0xff]
      %v205 = vld [vmem:[%s169 + $0xa4] sm:$0xf]
      %v206 = vld [vmem:[%s169 + $0xa8] sm:$0xff]
      %v207 = vld [vmem:[%s169 + $0xb0] sm:$0xf]
      %v208 = vld [vmem:[%s169 + $0xb4] sm:$0xff]
      %v209 = vld [vmem:[%s169 + $0xbc] sm:$0xf]
      %v210 = vld [vmem:[%s169 + $0xc0] sm:$0xff]
      %v211 = vld [vmem:[%s169 + $0xc8] sm:$0xf]
      %v212 = vld [vmem:[%s169 + $0xcc] sm:$0xff]
      %v213 = vld [vmem:[%s169 + $0xd4] sm:$0xf]
      %v214 = vld [vmem:[%s169 + $0xd8] sm:$0xff]
      %v215 = vld [vmem:[%s169 + $0xe0] sm:$0xf]
      %v216 = vld [vmem:[%s169 + $0xe4] sm:$0xff]
      %v217 = vld [vmem:[%s169 + $0xec] sm:$0xf]
      %v218 = vld [vmem:[%s169 + $0xf0] sm:$0xff]
      %v219 = vld [vmem:[%s169 + $0xf8] sm:$0xf]
      %v220 = vld [vmem:[%s169 + $0xfc] sm:$0xff]
      %v221 = vld [vmem:[%s169 + $0x104] sm:$0xf]
      %v222 = vld [vmem:[%s169 + $0x108] sm:$0xff]
      %v223 = vld [vmem:[%s169 + $0x110] sm:$0xf]
      %v224 = vld [vmem:[%s169 + $0x114] sm:$0xff]
      %v225 = vld [vmem:[%s169 + $0x11c] sm:$0xf]
      %v226 = vld [vmem:[%s169 + $0x120] sm:$0xff]
      %v227 = vld [vmem:[%s169 + $0x128] sm:$0xf]
      %v228 = vld [vmem:[%s169 + $0x12c] sm:$0xff]
      %v229 = vld [vmem:[%s169 + $0x134] sm:$0xf]
      %v230 = vld [vmem:[%s169 + $0x138] sm:$0xff]
      %v231 = vld [vmem:[%s169 + $0x140] sm:$0xf]
      %v232 = vld [vmem:[%s169 + $0x144] sm:$0xff]
      %v233 = vld [vmem:[%s169 + $0x14c] sm:$0xf]
      %v234 = vld [vmem:[%s169 + $0x150] sm:$0xff]
      %v235 = vld [vmem:[%s169 + $0x158] sm:$0xf]
      %v236 = vld [vmem:[%s169 + $0x15c] sm:$0xff]
      %v237 = vld [vmem:[%s169 + $0x164] sm:$0xf]
      %v238 = vld [vmem:[%s169 + $0x168] sm:$0xff]
      %v239 = vld [vmem:[%s169 + $0x170] sm:$0xf]
      %v240 = vld [vmem:[%s169 + $0x174] sm:$0xff]
      %v241 = vld [vmem:[%s169 + $0x17c] sm:$0xf]
      %v242 = vld [vmem:[%s1] sm:$0xf]
      %v243 = vld [vmem:[%s1 + $0x4] sm:$0xf]
      %v244 = vld [vmem:[%s1 + $0x8] sm:$0xf]
      %v245 = vld [vmem:[%s1 + $0xc] sm:$0xf]
      %v246 = vld [vmem:[%s1 + $0x10] sm:$0xf]
      %v247 = vld [vmem:[%s1 + $0x14] sm:$0xf]
      %v248 = vld [vmem:[%s1 + $0x18] sm:$0xf]
      %v249 = vld [vmem:[%s1 + $0x1c] sm:$0xf]
      %v250 = vld [vmem:[%s1 + $0x20] sm:$0xf]
      %v251 = vld [vmem:[%s1 + $0x24] sm:$0xf]
      %v252 = vld [vmem:[%s1 + $0x28] sm:$0xf]
      %v253 = vld [vmem:[%s1 + $0x2c] sm:$0xf]
      %v254 = vld [vmem:[%s1 + $0x30] sm:$0xf]
      %v255 = vld [vmem:[%s1 + $0x34] sm:$0xf]
      %v256 = vld [vmem:[%s1 + $0x38] sm:$0xf]
      %v257 = vld [vmem:[%s1 + $0x3c] sm:$0xf]
      %v258 = vld [vmem:[%s1 + $0x40] sm:$0xf]
      %v259 = vld [vmem:[%s1 + $0x44] sm:$0xf]
      %v260 = vld [vmem:[%s1 + $0x48] sm:$0xf]
      %v261 = vld [vmem:[%s1 + $0x4c] sm:$0xf]
      %v262 = vld [vmem:[%s1 + $0x50] sm:$0xf]
      %v263 = vld [vmem:[%s1 + $0x54] sm:$0xf]
      %v264 = vld [vmem:[%s1 + $0x58] sm:$0xf]
      %v265 = vld [vmem:[%s1 + $0x5c] sm:$0xf]
      %v266 = vld [vmem:[%s1 + $0x60] sm:$0xf]
      %v267 = vld [vmem:[%s1 + $0x64] sm:$0xf]
      %v268 = vld [vmem:[%s1 + $0x68] sm:$0xf]
      %v269 = vld [vmem:[%s1 + $0x6c] sm:$0xf]
      %v270 = vld [vmem:[%s1 + $0x70] sm:$0xf]
      %v271 = vld [vmem:[%s1 + $0x74] sm:$0xf]
      %v272 = vld [vmem:[%s1 + $0x78] sm:$0xf]
      %v273 = vld [vmem:[%s1 + $0x7c] sm:$0xf]
      %v274 = vld [vmem:[%s1 + $0x80] sm:$0xf]
      %v275 = vld [vmem:[%s1 + $0x84] sm:$0xf]
      %v276 = vld [vmem:[%s1 + $0x88] sm:$0xf]
      %v277 = vld [vmem:[%s1 + $0x8c] sm:$0xf]
      %v278 = vld [vmem:[%s1 + $0x90] sm:$0x7]
      %v279 = vld [vmem:[%s2] sm:$0x1]
      %v281 = vlaneseq
      %v282 = vshrl.u32 %v281, 7
      %v283 = vsub.s32 0, %v282
      %v284 = vrot.slane %v279, %v283
      %v350 = vunpack.c.l.b16 %v178
      %v351 = vunpack.c.h.b16 %v178
      %v352 = vunpack.c.l.b16 %v179
      %v353 = vunpack.c.l.b16 %v180
      %v354 = vunpack.c.h.b16 %v180
      %v355 = vunpack.c.l.b16 %v181
      %v356 = vunpack.c.l.b16 %v182
      %v357 = vunpack.c.h.b16 %v182
      %v358 = vunpack.c.l.b16 %v183
      %v359 = vunpack.c.l.b16 %v184
      %v360 = vunpack.c.h.b16 %v184
      %v361 = vunpack.c.l.b16 %v185
      %v362 = vunpack.c.l.b16 %v186
      %v363 = vunpack.c.h.b16 %v186
      %v364 = vunpack.c.l.b16 %v187
      %v365 = vunpack.c.l.b16 %v188
      %v366 = vunpack.c.h.b16 %v188
      %v367 = vunpack.c.l.b16 %v189
      %v368 = vunpack.c.l.b16 %v190
      %v369 = vunpack.c.h.b16 %v190
      %v370 = vunpack.c.l.b16 %v191
      %v371 = vunpack.c.l.b16 %v192
      %v372 = vunpack.c.h.b16 %v192
      %v373 = vunpack.c.l.b16 %v193
      %v374 = vunpack.c.l.b16 %v194
      %v375 = vunpack.c.h.b16 %v194
      %v376 = vunpack.c.l.b16 %v195
      %v377 = vunpack.c.l.b16 %v196
      %v378 = vunpack.c.h.b16 %v196
      %v379 = vunpack.c.l.b16 %v197
      %v380 = vunpack.c.l.b16 %v198
      %v381 = vunpack.c.h.b16 %v198
      %v382 = vunpack.c.l.b16 %v199
      %v383 = vunpack.c.l.b16 %v200
      %v384 = vunpack.c.h.b16 %v200
      %v385 = vunpack.c.l.b16 %v201
      %v386 = vunpack.c.l.b16 %v202
      %v387 = vunpack.c.h.b16 %v202
      %v388 = vunpack.c.l.b16 %v203
      %v389 = vunpack.c.l.b16 %v204
      %v390 = vunpack.c.h.b16 %v204
      %v391 = vunpack.c.l.b16 %v205
      %v392 = vunpack.c.l.b16 %v206
      %v393 = vunpack.c.h.b16 %v206
      %v394 = vunpack.c.l.b16 %v207
      %v395 = vunpack.c.l.b16 %v208
      %v396 = vunpack.c.h.b16 %v208
      %v397 = vunpack.c.l.b16 %v209
      %v398 = vunpack.c.l.b16 %v210
      %v399 = vunpack.c.h.b16 %v210
      %v400 = vunpack.c.l.b16 %v211
      %v401 = vunpack.c.l.b16 %v212
      %v402 = vunpack.c.h.b16 %v212
      %v403 = vunpack.c.l.b16 %v213
      %v404 = vunpack.c.l.b16 %v214
      %v405 = vunpack.c.h.b16 %v214
      %v406 = vunpack.c.l.b16 %v215
      %v407 = vunpack.c.l.b16 %v216
      %v408 = vunpack.c.h.b16 %v216
      %v409 = vunpack.c.l.b16 %v217
      %v410 = vunpack.c.l.b16 %v218
      %v411 = vunpack.c.h.b16 %v218
      %v412 = vunpack.c.l.b16 %v219
      %v413 = vunpack.c.l.b16 %v220
      %v414 = vunpack.c.h.b16 %v220
      %v415 = vunpack.c.l.b16 %v221
      %v416 = vunpack.c.l.b16 %v222
      %v417 = vunpack.c.h.b16 %v222
      %v418 = vunpack.c.l.b16 %v223
      %v419 = vunpack.c.l.b16 %v224
      %v420 = vunpack.c.h.b16 %v224
      %v421 = vunpack.c.l.b16 %v225
      %v422 = vunpack.c.l.b16 %v226
      %v423 = vunpack.c.h.b16 %v226
      %v424 = vunpack.c.l.b16 %v227
      %v425 = vunpack.c.l.b16 %v228
      %v426 = vunpack.c.h.b16 %v228
      %v427 = vunpack.c.l.b16 %v229
      %v428 = vunpack.c.l.b16 %v230
      %v429 = vunpack.c.h.b16 %v230
      %v430 = vunpack.c.l.b16 %v231
      %v431 = vunpack.c.l.b16 %v232
      %v432 = vunpack.c.h.b16 %v232
      %v433 = vunpack.c.l.b16 %v233
      %v434 = vunpack.c.l.b16 %v234
      %v435 = vunpack.c.h.b16 %v234
      %v436 = vunpack.c.l.b16 %v235
      %v437 = vunpack.c.l.b16 %v236
      %v438 = vunpack.c.h.b16 %v236
      %v439 = vunpack.c.l.b16 %v237
      %v440 = vunpack.c.l.b16 %v238
      %v441 = vunpack.c.h.b16 %v238
      %v442 = vunpack.c.l.b16 %v239
      %v443 = vunpack.c.l.b16 %v240
      %v444 = vunpack.c.h.b16 %v240
      %v445 = vunpack.c.l.b16 %v241
      %v446 = vpack.c.b16 %v353, %v350
      %v447 = vpack.c.b16 %v354, %v351
      %v448 = vpack.c.b16 %v355, %v352
      %v449 = vpack.c.b16 %v359, %v356
      %v450 = vpack.c.b16 %v360, %v357
      %v451 = vpack.c.b16 %v361, %v358
      %v452 = vpack.c.b16 %v365, %v362
      %v453 = vpack.c.b16 %v366, %v363
      %v454 = vpack.c.b16 %v367, %v364
      %v455 = vpack.c.b16 %v371, %v368
      %v456 = vpack.c.b16 %v372, %v369
      %v457 = vpack.c.b16 %v373, %v370
      %v458 = vpack.c.b16 %v377, %v374
      %v459 = vpack.c.b16 %v378, %v375
      %v460 = vpack.c.b16 %v379, %v376
      %v461 = vpack.c.b16 %v383, %v380
      %v462 = vpack.c.b16 %v384, %v381
      %v463 = vpack.c.b16 %v385, %v382
      %v464 = vpack.c.b16 %v389, %v386
      %v465 = vpack.c.b16 %v390, %v387
      %v466 = vpack.c.b16 %v391, %v388
      %v467 = vpack.c.b16 %v395, %v392
      %v468 = vpack.c.b16 %v396, %v393
      %v469 = vpack.c.b16 %v397, %v394
      %v470 = vpack.c.b16 %v401, %v398
      %v471 = vpack.c.b16 %v402, %v399
      %v472 = vpack.c.b16 %v403, %v400
      %v473 = vpack.c.b16 %v407, %v404
      %v474 = vpack.c.b16 %v408, %v405
      %v475 = vpack.c.b16 %v409, %v406
      %v476 = vpack.c.b16 %v413, %v410
      %v477 = vpack.c.b16 %v414, %v411
      %v478 = vpack.c.b16 %v415, %v412
      %v479 = vpack.c.b16 %v419, %v416
      %v480 = vpack.c.b16 %v420, %v417
      %v481 = vpack.c.b16 %v421, %v418
      %v482 = vpack.c.b16 %v425, %v422
      %v483 = vpack.c.b16 %v426, %v423
      %v484 = vpack.c.b16 %v427, %v424
      %v485 = vpack.c.b16 %v431, %v428
      %v486 = vpack.c.b16 %v432, %v429
      %v487 = vpack.c.b16 %v433, %v430
      %v488 = vpack.c.b16 %v437, %v434
      %v489 = vpack.c.b16 %v438, %v435
      %v490 = vpack.c.b16 %v439, %v436
      %v491 = vpack.c.b16 %v443, %v440
      %v492 = vpack.c.b16 %v444, %v441
      %v493 = vpack.c.b16 %v445, %v442
      %v563 = vunpack.c.l.b16 %v242
      %v564 = vunpack.c.l.b16 %v243
      %v565 = vunpack.c.l.b16 %v244
      %v566 = vunpack.c.l.b16 %v245
      %v567 = vunpack.c.l.b16 %v246
      %v568 = vunpack.c.l.b16 %v247
      %v569 = vunpack.c.l.b16 %v248
      %v570 = vunpack.c.l.b16 %v249
      %v571 = vunpack.c.l.b16 %v250
      %v572 = vunpack.c.l.b16 %v251
      %v573 = vunpack.c.l.b16 %v252
      %v574 = vunpack.c.l.b16 %v253
      %v575 = vunpack.c.l.b16 %v254
      %v576 = vunpack.c.l.b16 %v255
      %v577 = vunpack.c.l.b16 %v256
      %v578 = vunpack.c.l.b16 %v257
      %v579 = vunpack.c.l.b16 %v258
      %v580 = vunpack.c.l.b16 %v259
      %v581 = vunpack.c.l.b16 %v260
      %v582 = vunpack.c.l.b16 %v261
      %v583 = vunpack.c.l.b16 %v262
      %v584 = vunpack.c.l.b16 %v263
      %v585 = vunpack.c.l.b16 %v264
      %v586 = vunpack.c.l.b16 %v265
      %v587 = vunpack.c.l.b16 %v266
      %v588 = vunpack.c.l.b16 %v267
      %v589 = vunpack.c.l.b16 %v268
      %v590 = vunpack.c.l.b16 %v269
      %v591 = vunpack.c.l.b16 %v270
      %v592 = vunpack.c.l.b16 %v271
      %v593 = vunpack.c.l.b16 %v272
      %v594 = vunpack.c.l.b16 %v273
      %v595 = vunpack.c.l.b16 %v274
      %v596 = vunpack.c.l.b16 %v275
      %v597 = vunpack.c.l.b16 %v276
      %v598 = vunpack.c.l.b16 %v277
      %v599 = vunpack.c.l.b16 %v278
      %v600 = vpack.c.b16 %v564, %v563
      %v601 = vpack.c.b16 %v566, %v565
      %v602 = vpack.c.b16 %v568, %v567
      %v603 = vpack.c.b16 %v570, %v569
      %v604 = vpack.c.b16 %v572, %v571
      %v605 = vpack.c.b16 %v574, %v573
      %v606 = vpack.c.b16 %v576, %v575
      %v607 = vpack.c.b16 %v578, %v577
      %v608 = vpack.c.b16 %v580, %v579
      %v609 = vpack.c.b16 %v582, %v581
      %v610 = vpack.c.b16 %v584, %v583
      %v611 = vpack.c.b16 %v586, %v585
      %v612 = vpack.c.b16 %v588, %v587
      %v613 = vpack.c.b16 %v590, %v589
      %v614 = vpack.c.b16 %v592, %v591
      %v615 = vpack.c.b16 %v594, %v593
      %v616 = vpack.c.b16 %v596, %v595
      %v617 = vpack.c.b16 %v598, %v597
      %v618 = vpack.c.b16 %v599, %v599
      %vm637 = vcmask 310272
      %v639 = vsel %vm637, %v448, 0
      %v642 = vsel %vm637, %v451, 0
      %v645 = vsel %vm637, %v454, 0
      %v648 = vsel %vm637, %v457, 0
      %v651 = vsel %vm637, %v460, 0
      %v654 = vsel %vm637, %v463, 0
      %v657 = vsel %vm637, %v466, 0
      %v660 = vsel %vm637, %v469, 0
      %v663 = vsel %vm637, %v472, 0
      %v666 = vsel %vm637, %v475, 0
      %v669 = vsel %vm637, %v478, 0
      %v672 = vsel %vm637, %v481, 0
      %v675 = vsel %vm637, %v484, 0
      %v678 = vsel %vm637, %v487, 0
      %v681 = vsel %vm637, %v490, 0
      %v684 = vsel %vm637, %v493, 0
      %vm686 = vcmask 1042432
      %v688 = vsel %vm686, %v618, 0
      %690 = vmatprep.subr.bf16.mxu0 0
      %691 = vmatpush1.bf16.msra.mxu0 %v600
      %692 = vmatprep.subr.bf16.mxu0 0
      %693 = vmatpush1.bf16.msra.mxu0 %v601
      %694 = vmatprep.subr.bf16.mxu0 0
      %695 = vmatpush1.bf16.msra.mxu0 %v602
      %696 = vmatprep.subr.bf16.mxu0 0
      %697 = vmatpush1.bf16.msra.mxu0 %v603
      %698 = vmatprep.subr.bf16.mxu0 0
      %699 = vmatpush1.bf16.msra.mxu0 %v604
      %700 = vmatprep.subr.bf16.mxu0 0
      %701 = vmatpush1.bf16.msra.mxu0 %v605
      %702 = vmatprep.subr.bf16.mxu0 0
      %703 = vmatpush1.bf16.msra.mxu0 %v606
      %704 = vmatprep.subr.bf16.mxu0 0
      %705 = vmatpush1.bf16.msra.mxu0 %v607
      %706 = vmatprep.subr.bf16.mxu0 0
      %707 = vmatpush1.bf16.msra.mxu0 %v608
      %708 = vmatprep.subr.bf16.mxu0 0
      %709 = vmatpush1.bf16.msra.mxu0 %v609
      %710 = vmatprep.subr.bf16.mxu0 0
      %711 = vmatpush1.bf16.msra.mxu0 %v610
      %712 = vmatprep.subr.bf16.mxu0 0
      %713 = vmatpush1.bf16.msra.mxu0 %v611
      %714 = vmatprep.subr.bf16.mxu0 0
      %715 = vmatpush1.bf16.msra.mxu0 %v612
      %716 = vmatprep.subr.bf16.mxu0 0
      %717 = vmatpush1.bf16.msra.mxu0 %v613
      %718 = vmatprep.subr.bf16.mxu0 0
      %719 = vmatpush1.bf16.msra.mxu0 %v614
      %720 = vmatprep.subr.bf16.mxu0 0
      %721 = vmatpush1.bf16.msra.mxu0 %v615
      %722 = vmatprep.mubr.bf16.mxu0 %v447
      %723 = vmatmul.mubr.bf16.gmra.mrb[0].mxu0 %v446
      %v724 = vpop.f32.mrb[0].mxu0
      %v725 = vadd.f32 %v284, %v724
      %v726 = vpop.f32.mrb[0].mxu0
      %v727 = vpop.f32.mrb[0].mxu0
      %v728 = vadd.f32 %v284, %v727
      %v729 = vpop.f32.mrb[0].mxu0
      %730 = vmatprep.mubr.bf16.mxu0 %v450
      %731 = vmatmul.mubr.bf16.gmra.mrb[0].mxu0 %v449
      %v732 = vpop.f32.mrb[0].mxu0
      %v733 = vadd.f32 %v284, %v732
      %v734 = vpop.f32.mrb[0].mxu0
      %v735 = vpop.f32.mrb[0].mxu0
      %v736 = vadd.f32 %v284, %v735
      %v737 = vpop.f32.mrb[0].mxu0
      %738 = vmatprep.mubr.bf16.mxu0 %v453
      %739 = vmatmul.mubr.bf16.gmra.mrb[0].mxu0 %v452
      %v740 = vpop.f32.mrb[0].mxu0
      %v741 = vadd.f32 %v284, %v740
      %v742 = vpop.f32.mrb[0].mxu0
      %v743 = vpop.f32.mrb[0].mxu0
      %v744 = vadd.f32 %v284, %v743
      %v745 = vpop.f32.mrb[0].mxu0
      %746 = vmatprep.mubr.bf16.mxu0 %v456
      %747 = vmatmul.mubr.bf16.gmra.mrb[0].mxu0 %v455
      %v748 = vpop.f32.mrb[0].mxu0
      %v749 = vadd.f32 %v284, %v748
      %v750 = vpop.f32.mrb[0].mxu0
      %v751 = vpop.f32.mrb[0].mxu0
      %v752 = vadd.f32 %v284, %v751
      %v753 = vpop.f32.mrb[0].mxu0
      %754 = vmatprep.mubr.bf16.mxu0 %v459
      %755 = vmatmul.mubr.bf16.gmra.mrb[0].mxu0 %v458
      %v756 = vpop.f32.mrb[0].mxu0
      %v757 = vadd.f32 %v284, %v756
      %v758 = vpop.f32.mrb[0].mxu0
      %v759 = vpop.f32.mrb[0].mxu0
      %v760 = vadd.f32 %v284, %v759
      %v761 = vpop.f32.mrb[0].mxu0
      %762 = vmatprep.mubr.bf16.mxu0 %v462
      %763 = vmatmul.mubr.bf16.gmra.mrb[0].mxu0 %v461
      %v764 = vpop.f32.mrb[0].mxu0
      %v765 = vadd.f32 %v284, %v764
      %v766 = vpop.f32.mrb[0].mxu0
      %v767 = vpop.f32.mrb[0].mxu0
      %v768 = vadd.f32 %v284, %v767
      %v769 = vpop.f32.mrb[0].mxu0
      %770 = vmatprep.mubr.bf16.mxu0 %v465
      %771 = vmatmul.mubr.bf16.gmra.mrb[0].mxu0 %v464
      %v772 = vpop.f32.mrb[0].mxu0
      %v773 = vadd.f32 %v284, %v772
      %v774 = vpop.f32.mrb[0].mxu0
      %v775 = vpop.f32.mrb[0].mxu0
      %v776 = vadd.f32 %v284, %v775
      %v777 = vpop.f32.mrb[0].mxu0
      %778 = vmatprep.mubr.bf16.mxu0 %v468
      %779 = vmatmul.mubr.bf16.gmra.mrb[0].mxu0 %v467
      %v780 = vpop.f32.mrb[0].mxu0
      %v781 = vadd.f32 %v284, %v780
      %v782 = vpop.f32.mrb[0].mxu0
      %v783 = vpop.f32.mrb[0].mxu0
      %v784 = vadd.f32 %v284, %v783
      %v785 = vpop.f32.mrb[0].mxu0
      %786 = vmatprep.mubr.bf16.mxu0 %v471
      %787 = vmatmul.mubr.bf16.gmra.mrb[0].mxu0 %v470
      %v788 = vpop.f32.mrb[0].mxu0
      %v789 = vadd.f32 %v284, %v788
      %v790 = vpop.f32.mrb[0].mxu0
      %v791 = vpop.f32.mrb[0].mxu0
      %v792 = vadd.f32 %v284, %v791
      %v793 = vpop.f32.mrb[0].mxu0
      %794 = vmatprep.mubr.bf16.mxu0 %v474
      %795 = vmatmul.mubr.bf16.gmra.mrb[0].mxu0 %v473
      %v796 = vpop.f32.mrb[0].mxu0
      %v797 = vadd.f32 %v284, %v796
      %v798 = vpop.f32.mrb[0].mxu0
      %v799 = vpop.f32.mrb[0].mxu0
      %v800 = vadd.f32 %v284, %v799
      %v801 = vpop.f32.mrb[0].mxu0
      %802 = vmatprep.mubr.bf16.mxu0 %v477
      %803 = vmatmul.mubr.bf16.gmra.mrb[0].mxu0 %v476
      %v804 = vpop.f32.mrb[0].mxu0
      %v805 = vadd.f32 %v284, %v804
      %v806 = vpop.f32.mrb[0].mxu0
      %v807 = vpop.f32.mrb[0].mxu0
      %v808 = vadd.f32 %v284, %v807
      %v809 = vpop.f32.mrb[0].mxu0
      %810 = vmatprep.mubr.bf16.mxu0 %v480
      %811 = vmatmul.mubr.bf16.gmra.mrb[0].mxu0 %v479
      %v812 = vpop.f32.mrb[0].mxu0
      %v813 = vadd.f32 %v284, %v812
      %v814 = vpop.f32.mrb[0].mxu0
      %v815 = vpop.f32.mrb[0].mxu0
      %v816 = vadd.f32 %v284, %v815
      %v817 = vpop.f32.mrb[0].mxu0
      %818 = vmatprep.mubr.bf16.mxu0 %v483
      %819 = vmatmul.mubr.bf16.gmra.mrb[0].mxu0 %v482
      %v820 = vpop.f32.mrb[0].mxu0
      %v821 = vadd.f32 %v284, %v820
      %v822 = vpop.f32.mrb[0].mxu0
      %v823 = vpop.f32.mrb[0].mxu0
      %v824 = vadd.f32 %v284, %v823
      %v825 = vpop.f32.mrb[0].mxu0
      %826 = vmatprep.mubr.bf16.mxu0 %v486
      %827 = vmatmul.mubr.bf16.gmra.mrb[0].mxu0 %v485
      %v828 = vpop.f32.mrb[0].mxu0
      %v829 = vadd.f32 %v284, %v828
      %v830 = vpop.f32.mrb[0].mxu0
      %v831 = vpop.f32.mrb[0].mxu0
      %v832 = vadd.f32 %v284, %v831
      %v833 = vpop.f32.mrb[0].mxu0
      %834 = vmatprep.mubr.bf16.mxu0 %v489
      %835 = vmatmul.mubr.bf16.gmra.mrb[0].mxu0 %v488
      %v836 = vpop.f32.mrb[0].mxu0
      %v837 = vadd.f32 %v284, %v836
      %v838 = vpop.f32.mrb[0].mxu0
      %v839 = vpop.f32.mrb[0].mxu0
      %v840 = vadd.f32 %v284, %v839
      %v841 = vpop.f32.mrb[0].mxu0
      %842 = vmatprep.mubr.bf16.mxu0 %v492
      %843 = vmatmul.mubr.bf16.gmra.mrb[0].mxu0 %v491
      %v844 = vpop.f32.mrb[0].mxu0
      %v845 = vadd.f32 %v284, %v844
      %v846 = vpop.f32.mrb[0].mxu0
      %v847 = vpop.f32.mrb[0].mxu0
      %v848 = vadd.f32 %v284, %v847
      %v849 = vpop.f32.mrb[0].mxu0
      %850 = vdwg.mxu0
      %851 = vmatprep.subr.bf16.mxu0 0
      %852 = vmatpush1.bf16.msra.mxu0 %v616
      %853 = vmatprep.subr.bf16.mxu0 0
      %854 = vmatpush1.bf16.msra.mxu0 %v617
      %855 = vmatprep.subr.bf16.mxu0 0
      %856 = vmatpush1.bf16.msra.mxu0 %v688
      %857 = vmatprep.subr.bf16.mxu0 0
      %858 = vmatpush1.bf16.msra.mxu0 0
      %859 = vmatprep.subr.bf16.mxu0 0
      %860 = vmatpush1.bf16.msra.mxu0 0
      %861 = vmatprep.subr.bf16.mxu0 0
      %862 = vmatpush1.bf16.msra.mxu0 0
      %863 = vmatprep.subr.bf16.mxu0 0
      %864 = vmatpush1.bf16.msra.mxu0 0
      %865 = vmatprep.subr.bf16.mxu0 0
      %866 = vmatpush1.bf16.msra.mxu0 0
      %867 = vmatprep.subr.bf16.mxu0 0
      %868 = vmatpush1.bf16.msra.mxu0 0
      %869 = vmatprep.subr.bf16.mxu0 0
      %870 = vmatpush1.bf16.msra.mxu0 0
      %871 = vmatprep.subr.bf16.mxu0 0
      %872 = vmatpush1.bf16.msra.mxu0 0
      %873 = vmatprep.subr.bf16.mxu0 0
      %874 = vmatpush1.bf16.msra.mxu0 0
      %875 = vmatprep.subr.bf16.mxu0 0
      %876 = vmatpush1.bf16.msra.mxu0 0
      %877 = vmatprep.subr.bf16.mxu0 0
      %878 = vmatpush1.bf16.msra.mxu0 0
      %879 = vmatprep.subr.bf16.mxu0 0
      %880 = vmatpush1.bf16.msra.mxu0 0
      %881 = vmatprep.subr.bf16.mxu0 0
      %882 = vmatpush1.bf16.msra.mxu0 0
      %883 = vmatprep.mubr.bf16.mxu0 0
      %884 = vmatmul.mubr.bf16.gmra.mrb[0].mxu0 %v639
      %v885 = vpop.f32.mrb[0].mxu0
      %v886 = vadd.f32 %v725, %v885
      %v887 = vpop.f32.mrb[0].mxu0
      %v888 = vpop.f32.mrb[0].mxu0
      %v889 = vadd.f32 %v728, %v888
      %v890 = vpop.f32.mrb[0].mxu0
      %891 = vmatprep.mubr.bf16.mxu0 0
      %892 = vmatmul.mubr.bf16.gmra.mrb[0].mxu0 %v642
      %v893 = vpop.f32.mrb[0].mxu0
      %v894 = vadd.f32 %v733, %v893
      %v895 = vpop.f32.mrb[0].mxu0
      %v896 = vpop.f32.mrb[0].mxu0
      %v897 = vadd.f32 %v736, %v896
      %v898 = vpop.f32.mrb[0].mxu0
      %899 = vmatprep.mubr.bf16.mxu0 0
      %900 = vmatmul.mubr.bf16.gmra.mrb[0].mxu0 %v645
      %v901 = vpop.f32.mrb[0].mxu0
      %v902 = vadd.f32 %v741, %v901
      %v903 = vpop.f32.mrb[0].mxu0
      %v904 = vpop.f32.mrb[0].mxu0
      %v905 = vadd.f32 %v744, %v904
      %v906 = vpop.f32.mrb[0].mxu0
      %907 = vmatprep.mubr.bf16.mxu0 0
      %908 = vmatmul.mubr.bf16.gmra.mrb[0].mxu0 %v648
      %v909 = vpop.f32.mrb[0].mxu0
      %v910 = vadd.f32 %v749, %v909
      %v911 = vpop.f32.mrb[0].mxu0
      %v912 = vpop.f32.mrb[0].mxu0
      %v913 = vadd.f32 %v752, %v912
      %v914 = vpop.f32.mrb[0].mxu0
      %915 = vmatprep.mubr.bf16.mxu0 0
      %916 = vmatmul.mubr.bf16.gmra.mrb[0].mxu0 %v651
      %v917 = vpop.f32.mrb[0].mxu0
      %v918 = vadd.f32 %v757, %v917
      %v919 = vpop.f32.mrb[0].mxu0
      %v920 = vpop.f32.mrb[0].mxu0
      %v921 = vadd.f32 %v760, %v920
      %v922 = vpop.f32.mrb[0].mxu0
      %923 = vmatprep.mubr.bf16.mxu0 0
      %924 = vmatmul.mubr.bf16.gmra.mrb[0].mxu0 %v654
      %v925 = vpop.f32.mrb[0].mxu0
      %v926 = vadd.f32 %v765, %v925
      %v927 = vpop.f32.mrb[0].mxu0
      %v928 = vpop.f32.mrb[0].mxu0
      %v929 = vadd.f32 %v768, %v928
      %v930 = vpop.f32.mrb[0].mxu0
      %931 = vmatprep.mubr.bf16.mxu0 0
      %932 = vmatmul.mubr.bf16.gmra.mrb[0].mxu0 %v657
      %v933 = vpop.f32.mrb[0].mxu0
      %v934 = vadd.f32 %v773, %v933
      %v935 = vpop.f32.mrb[0].mxu0
      %v936 = vpop.f32.mrb[0].mxu0
      %v937 = vadd.f32 %v776, %v936
      %v938 = vpop.f32.mrb[0].mxu0
      %939 = vmatprep.mubr.bf16.mxu0 0
      %940 = vmatmul.mubr.bf16.gmra.mrb[0].mxu0 %v660
      %v941 = vpop.f32.mrb[0].mxu0
      %v942 = vadd.f32 %v781, %v941
      %v943 = vpop.f32.mrb[0].mxu0
      %v944 = vpop.f32.mrb[0].mxu0
      %v945 = vadd.f32 %v784, %v944
      %v946 = vpop.f32.mrb[0].mxu0
      %947 = vmatprep.mubr.bf16.mxu0 0
      %948 = vmatmul.mubr.bf16.gmra.mrb[0].mxu0 %v663
      %v949 = vpop.f32.mrb[0].mxu0
      %v950 = vadd.f32 %v789, %v949
      %v951 = vpop.f32.mrb[0].mxu0
      %v952 = vpop.f32.mrb[0].mxu0
      %v953 = vadd.f32 %v792, %v952
      %v954 = vpop.f32.mrb[0].mxu0
      %955 = vmatprep.mubr.bf16.mxu0 0
      %956 = vmatmul.mubr.bf16.gmra.mrb[0].mxu0 %v666
      %v957 = vpop.f32.mrb[0].mxu0
      %v958 = vadd.f32 %v797, %v957
      %v959 = vpop.f32.mrb[0].mxu0
      %v960 = vpop.f32.mrb[0].mxu0
      %v961 = vadd.f32 %v800, %v960
      %v962 = vpop.f32.mrb[0].mxu0
      %963 = vmatprep.mubr.bf16.mxu0 0
      %964 = vmatmul.mubr.bf16.gmra.mrb[0].mxu0 %v669
      %v965 = vpop.f32.mrb[0].mxu0
      %v966 = vadd.f32 %v805, %v965
      %v967 = vpop.f32.mrb[0].mxu0
      %v968 = vpop.f32.mrb[0].mxu0
      %v969 = vadd.f32 %v808, %v968
      %v970 = vpop.f32.mrb[0].mxu0
      %971 = vmatprep.mubr.bf16.mxu0 0
      %972 = vmatmul.mubr.bf16.gmra.mrb[0].mxu0 %v672
      %v973 = vpop.f32.mrb[0].mxu0
      %v974 = vadd.f32 %v813, %v973
      %v975 = vpop.f32.mrb[0].mxu0
      %v976 = vpop.f32.mrb[0].mxu0
      %v977 = vadd.f32 %v816, %v976
      %v978 = vpop.f32.mrb[0].mxu0
      %979 = vmatprep.mubr.bf16.mxu0 0
      %980 = vmatmul.mubr.bf16.gmra.mrb[0].mxu0 %v675
      %v981 = vpop.f32.mrb[0].mxu0
      %v982 = vadd.f32 %v821, %v981
      %v983 = vpop.f32.mrb[0].mxu0
      %v984 = vpop.f32.mrb[0].mxu0
      %v985 = vadd.f32 %v824, %v984
      %v986 = vpop.f32.mrb[0].mxu0
      %987 = vmatprep.mubr.bf16.mxu0 0
      %988 = vmatmul.mubr.bf16.gmra.mrb[0].mxu0 %v678
      %v989 = vpop.f32.mrb[0].mxu0
      %v990 = vadd.f32 %v829, %v989
      %v991 = vpop.f32.mrb[0].mxu0
      %v992 = vpop.f32.mrb[0].mxu0
      %v993 = vadd.f32 %v832, %v992
      %v994 = vpop.f32.mrb[0].mxu0
      %995 = vmatprep.mubr.bf16.mxu0 0
      %996 = vmatmul.mubr.bf16.gmra.mrb[0].mxu0 %v681
      %v997 = vpop.f32.mrb[0].mxu0
      %v998 = vadd.f32 %v837, %v997
      %v999 = vpop.f32.mrb[0].mxu0
      %v1000 = vpop.f32.mrb[0].mxu0
      %v1001 = vadd.f32 %v840, %v1000
      %v1002 = vpop.f32.mrb[0].mxu0
      %1003 = vmatprep.mubr.bf16.mxu0 0
      %1004 = vmatmul.mubr.bf16.gmra.mrb[0].mxu0 %v684
      %v1005 = vpop.f32.mrb[0].mxu0
      %v1006 = vadd.f32 %v845, %v1005
      %v1007 = vpop.f32.mrb[0].mxu0
      %v1008 = vpop.f32.mrb[0].mxu0
      %v1009 = vadd.f32 %v848, %v1008
      %v1010 = vpop.f32.mrb[0].mxu0
      %1011 = vdwg.mxu0
      %v1012 = vmax.f32 %v886, 0.0
      %v1013 = vmax.f32 %v889, 0.0
      %v1014 = vmax.f32 %v894, 0.0
      %v1015 = vmax.f32 %v897, 0.0
      %v1016 = vmax.f32 %v902, 0.0
      %v1017 = vmax.f32 %v905, 0.0
      %v1018 = vmax.f32 %v910, 0.0
      %v1019 = vmax.f32 %v913, 0.0
      %v1020 = vmax.f32 %v918, 0.0
      %v1021 = vmax.f32 %v921, 0.0
      %v1022 = vmax.f32 %v926, 0.0
      %v1023 = vmax.f32 %v929, 0.0
      %v1024 = vmax.f32 %v934, 0.0
      %v1025 = vmax.f32 %v937, 0.0
      %v1026 = vmax.f32 %v942, 0.0
      %v1027 = vmax.f32 %v945, 0.0
      %v1028 = vmax.f32 %v950, 0.0
      %v1029 = vmax.f32 %v953, 0.0
      %v1030 = vmax.f32 %v958, 0.0
      %v1031 = vmax.f32 %v961, 0.0
      %v1032 = vmax.f32 %v966, 0.0
      %v1033 = vmax.f32 %v969, 0.0
      %v1034 = vmax.f32 %v974, 0.0
      %v1035 = vmax.f32 %v977, 0.0
      %v1036 = vmax.f32 %v982, 0.0
      %v1037 = vmax.f32 %v985, 0.0
      %v1038 = vmax.f32 %v990, 0.0
      %v1039 = vmax.f32 %v993, 0.0
      %v1040 = vmax.f32 %v998, 0.0
      %v1041 = vmax.f32 %v1001, 0.0
      %v1042 = vmax.f32 %v1006, 0.0
      %v1043 = vmax.f32 %v1009, 0.0
      %v1044 = vpack.c.bf16 %v1013, %v1012
      %v1045 = vpack.c.bf16 %v1015, %v1014
      %v1046 = vpack.c.bf16 %v1017, %v1016
      %v1047 = vpack.c.bf16 %v1019, %v1018
      %v1048 = vpack.c.bf16 %v1021, %v1020
      %v1049 = vpack.c.bf16 %v1023, %v1022
      %v1050 = vpack.c.bf16 %v1025, %v1024
      %v1051 = vpack.c.bf16 %v1027, %v1026
      %v1052 = vpack.c.bf16 %v1029, %v1028
      %v1053 = vpack.c.bf16 %v1031, %v1030
      %v1054 = vpack.c.bf16 %v1033, %v1032
      %v1055 = vpack.c.bf16 %v1035, %v1034
      %v1056 = vpack.c.bf16 %v1037, %v1036
      %v1057 = vpack.c.bf16 %v1039, %v1038
      %v1058 = vpack.c.bf16 %v1041, %v1040
      %v1059 = vpack.c.bf16 %v1043, %v1042
      %v1076 = vunpack.c.l.b16 %v1044
      %v1077 = vunpack.c.h.b16 %v1044
      %v1078 = vunpack.c.l.b16 %v1045
      %v1079 = vunpack.c.h.b16 %v1045
      %v1080 = vunpack.c.l.b16 %v1046
      %v1081 = vunpack.c.h.b16 %v1046
      %v1082 = vunpack.c.l.b16 %v1047
      %v1083 = vunpack.c.h.b16 %v1047
      %v1084 = vunpack.c.l.b16 %v1048
      %v1085 = vunpack.c.h.b16 %v1048
      %v1086 = vunpack.c.l.b16 %v1049
      %v1087 = vunpack.c.h.b16 %v1049
      %v1088 = vunpack.c.l.b16 %v1050
      %v1089 = vunpack.c.h.b16 %v1050
      %v1090 = vunpack.c.l.b16 %v1051
      %v1091 = vunpack.c.h.b16 %v1051
      %v1092 = vunpack.c.l.b16 %v1052
      %v1093 = vunpack.c.h.b16 %v1052
      %v1094 = vunpack.c.l.b16 %v1053
      %v1095 = vunpack.c.h.b16 %v1053
      %v1096 = vunpack.c.l.b16 %v1054
      %v1097 = vunpack.c.h.b16 %v1054
      %v1098 = vunpack.c.l.b16 %v1055
      %v1099 = vunpack.c.h.b16 %v1055
      %v1100 = vunpack.c.l.b16 %v1056
      %v1101 = vunpack.c.h.b16 %v1056
      %v1102 = vunpack.c.l.b16 %v1057
      %v1103 = vunpack.c.h.b16 %v1057
      %v1104 = vunpack.c.l.b16 %v1058
      %v1105 = vunpack.c.h.b16 %v1058
      %v1106 = vunpack.c.l.b16 %v1059
      %v1107 = vunpack.c.h.b16 %v1059
      %v1108 = vpack.c.b16 %v1076, %v1076
      %v1109 = vpack.c.b16 %v1077, %v1077
      %v1110 = vpack.c.b16 %v1078, %v1078
      %v1111 = vpack.c.b16 %v1079, %v1079
      %v1112 = vpack.c.b16 %v1080, %v1080
      %v1113 = vpack.c.b16 %v1081, %v1081
      %v1114 = vpack.c.b16 %v1082, %v1082
      %v1115 = vpack.c.b16 %v1083, %v1083
      %v1116 = vpack.c.b16 %v1084, %v1084
      %v1117 = vpack.c.b16 %v1085, %v1085
      %v1118 = vpack.c.b16 %v1086, %v1086
      %v1119 = vpack.c.b16 %v1087, %v1087
      %v1120 = vpack.c.b16 %v1088, %v1088
      %v1121 = vpack.c.b16 %v1089, %v1089
      %v1122 = vpack.c.b16 %v1090, %v1090
      %v1123 = vpack.c.b16 %v1091, %v1091
      %v1124 = vpack.c.b16 %v1092, %v1092
      %v1125 = vpack.c.b16 %v1093, %v1093
      %v1126 = vpack.c.b16 %v1094, %v1094
      %v1127 = vpack.c.b16 %v1095, %v1095
      %v1128 = vpack.c.b16 %v1096, %v1096
      %v1129 = vpack.c.b16 %v1097, %v1097
      %v1130 = vpack.c.b16 %v1098, %v1098
      %v1131 = vpack.c.b16 %v1099, %v1099
      %v1132 = vpack.c.b16 %v1100, %v1100
      %v1133 = vpack.c.b16 %v1101, %v1101
      %v1134 = vpack.c.b16 %v1102, %v1102
      %v1135 = vpack.c.b16 %v1103, %v1103
      %v1136 = vpack.c.b16 %v1104, %v1104
      %v1137 = vpack.c.b16 %v1105, %v1105
      %v1138 = vpack.c.b16 %v1106, %v1106
      %v1139 = vpack.c.b16 %v1107, %v1107
      %1172 = vst [vmem:[%s175] sm:$0xf] %v1108
      %1173 = vst [vmem:[%s175 + $0x4] sm:$0xf] %v1109
      %1174 = vst [vmem:[%s175 + $0x8] sm:$0xf] %v1110
      %1175 = vst [vmem:[%s175 + $0xc] sm:$0xf] %v1111
      %1176 = vst [vmem:[%s175 + $0x10] sm:$0xf] %v1112
      %1177 = vst [vmem:[%s175 + $0x14] sm:$0xf] %v1113
      %1178 = vst [vmem:[%s175 + $0x18] sm:$0xf] %v1114
      %1179 = vst [vmem:[%s175 + $0x1c] sm:$0xf] %v1115
      %1180 = vst [vmem:[%s175 + $0x20] sm:$0xf] %v1116
      %1181 = vst [vmem:[%s175 + $0x24] sm:$0xf] %v1117
      %1182 = vst [vmem:[%s175 + $0x28] sm:$0xf] %v1118
      %1183 = vst [vmem:[%s175 + $0x2c] sm:$0xf] %v1119
      %1184 = vst [vmem:[%s175 + $0x30] sm:$0xf] %v1120
      %1185 = vst [vmem:[%s175 + $0x34] sm:$0xf] %v1121
      %1186 = vst [vmem:[%s175 + $0x38] sm:$0xf] %v1122
      %1187 = vst [vmem:[%s175 + $0x3c] sm:$0xf] %v1123
      %1188 = vst [vmem:[%s175 + $0x40] sm:$0xf] %v1124
      %1189 = vst [vmem:[%s175 + $0x44] sm:$0xf] %v1125
      %1190 = vst [vmem:[%s175 + $0x48] sm:$0xf] %v1126
      %1191 = vst [vmem:[%s175 + $0x4c] sm:$0xf] %v1127
      %1192 = vst [vmem:[%s175 + $0x50] sm:$0xf] %v1128
      %1193 = vst [vmem:[%s175 + $0x54] sm:$0xf] %v1129
      %1194 = vst [vmem:[%s175 + $0x58] sm:$0xf] %v1130
      %1195 = vst [vmem:[%s175 + $0x5c] sm:$0xf] %v1131
      %1196 = vst [vmem:[%s175 + $0x60] sm:$0xf] %v1132
      %1197 = vst [vmem:[%s175 + $0x64] sm:$0xf] %v1133
      %1198 = vst [vmem:[%s175 + $0x68] sm:$0xf] %v1134
      %1199 = vst [vmem:[%s175 + $0x6c] sm:$0xf] %v1135
      %1200 = vst [vmem:[%s175 + $0x70] sm:$0xf] %v1136
      %1201 = vst [vmem:[%s175 + $0x74] sm:$0xf] %v1137
      %1202 = vst [vmem:[%s175 + $0x78] sm:$0xf] %v1138
      %1203 = vst [vmem:[%s175 + $0x7c] sm:$0xf] %v1139
      %s1204 = smul.u32 32, %s14
      %p1205 = scmp.lt.s32.totalorder %s1204, 127
      %s1206 = scalar_select %p1205, %s1204, 127
      %s1207 = smul.addr %s1206, 4
      %s1208 = scalar_lea.vmem %s3, %s1207
      // Predicated region
      $region33: #{conv1_forward.2} parent=31 // pred_check
        %p1209 = pneg %p100
      $region34: #{conv1_forward.2} parent=31 // pred_check_branch
        %1211 = sbr.rel (%p1209) target = $region36
      $region35: #{conv1_forward.2} parent=31 // pred_region
        %s1212 = smul.u32 32, %s14
      $region36: #{conv1_forward.2} parent=31 // pred_fallthru
        _
    $region32: #{conv1_forward.2} parent=5 // pred_fallthru
      _
    %p1213 = scmp.le.s32.totalorder 2, %s9
    // Predicated region
    $region37: #{conv1_forward.2} parent=5 // pred_check
      %p1214 = pneg %p1213
    $region38: #{conv1_forward.2} parent=5 // pred_check_branch
      %1216 = sbr.rel (%p1214) target = $region40
    $region39: #{conv1_forward.2} parent=5 // pred_region
      %s1217 = ssub.s32 %s9, 2
      // Predicated region
      $region41: #{conv1_forward.2} parent=39 // pred_check
        %p1218 = pneg %p106
      $region42: #{conv1_forward.2} parent=39 // pred_check_branch
        %1220 = sbr.rel (%p1218) target = $region44
      $region43: #{conv1_forward.2} parent=39 // pred_region
        %s1221 = smul.u32 32, %s15
        %p1222 = scmp.lt.s32.totalorder %s1221, 127
        %s1223 = scalar_select %p1222, %s1221, 127
        %s1224 = smul.addr %s1223, 4
        %s1225 = scalar_lea.vmem %s3, %s1224
      $region44: #{conv1_forward.2} parent=39 // pred_fallthru
        _
    $region40: #{conv1_forward.2} parent=5 // pred_fallthru
      _
  $region6: #{conv1_forward.2} parent=0 // loop_footer
    %s13 = sadd.s32 1, %s9
  $region7: #{conv1_forward.2} parent=0 // loop_footer_branch
    %8 = sbr.rel target = $region3
  $region8: #{conv1_forward.2} parent=0 // loop_exit
    _

</llo_original>
